<compile_context>
chip_gen: v6e
topology: v6e:2x2x1
jax: 0.10.0
libtpu: 0.0.40
codegen_flags: <defaults>
</compile_context>

<pallas_src>
import functools

import jax
import jax.numpy as jnp
from jax.experimental import pallas as pl
from jax.experimental.pallas import tpu as pltpu

EPS = 1e-5
LANE = 128


def _round_up(x, m):
    return ((x + m - 1) // m) * m


def _tpu_vmem_bytes():
    try:
        info = pltpu.get_tpu_info()
        v = int(getattr(info, "vmem_capacity_bytes", 0) or 0)
        if v > 0:
            return v
    except Exception:
        pass
    return 64 * 1024 * 1024          # conservative default (v7x per-TC VMEM)


_VMEM_BYTES = _tpu_vmem_bytes()
# Generation-aware scoped-VMEM limit and tile caps (v5e/v6e: 128 MiB, v7x: 64 MiB).
VMEM_LIMIT = int(min(_VMEM_BYTES * 3 // 4, 96 * 1024 * 1024))
M_TILE_CAP = 2048 if _VMEM_BYTES >= (100 << 20) else 1024    # rows per 1x1 tile
ROW_CAP = 2048 if _VMEM_BYTES >= (100 << 20) else 1024       # th*Wo per 3x3 tile


# ----------------------------------------------------------------------------
# Kernels
# ----------------------------------------------------------------------------
def _affine_relu(x_ref, s_ref, b_ref, m_valid):
    """relu(x * scale + shift) in f32; padded tail rows (if any) zeroed so the
    fused (sum, sum_sq) statistics stay exact with a non-divisible M grid."""
    a = jnp.maximum(x_ref[...].astype(jnp.float32) * s_ref[...] + b_ref[...], 0.0)
    if m_valid is not None:
        rid = (jax.lax.broadcasted_iota(jnp.int32, (a.shape[0], 1), 0)
               + pl.program_id(0) * a.shape[0])
        a = jnp.where(rid < m_valid, a, 0.0)
    return a


def _mm_plain_kernel(x_ref, s_ref, b_ref, w_ref, o_ref):
    """o = relu(x*scale+shift) @ w  (fused BN-affine + ReLU + 1x1 conv)."""
    a = _affine_relu(x_ref, s_ref, b_ref, None)
    o_ref[...] = jnp.dot(a.astype(jnp.bfloat16), w_ref[...],
                         preferred_element_type=jnp.float32).astype(o_ref.dtype)


def _mm_add_kernel(x_ref, s_ref, b_ref, w_ref, sc_ref, o_ref):
    """o = relu(x*scale+shift) @ w + shortcut  (conv3 + residual add, f32)."""
    a = _affine_relu(x_ref, s_ref, b_ref, None)
    y = jnp.dot(a.astype(jnp.bfloat16), w_ref[...],
                preferred_element_type=jnp.float32)
    o_ref[...] = (y + sc_ref[...].astype(jnp.float32)).astype(o_ref.dtype)


def _mm_stats_kernel(x_ref, s_ref, b_ref, w_ref, o_ref, st_ref, *, m_valid):
    """Like _mm_plain_kernel but also emits per-block (sum, sum_sq) of the f32
    result so the *next* BatchNorm's statistics need no extra HBM pass."""
    a = _affine_relu(x_ref, s_ref, b_ref, m_valid)
    y = jnp.dot(a.astype(jnp.bfloat16), w_ref[...],
                preferred_element_type=jnp.float32)
    o_ref[...] = y.astype(o_ref.dtype)
    st_ref[0, 0:1, :] = jnp.sum(y, axis=0, keepdims=True)
    st_ref[0, 1:2, :] = jnp.sum(y * y, axis=0, keepdims=True)


def _mm_fused_kernel(x_ref, s_ref, b_ref, w_ref, o1_ref, o2_ref, st_ref, *, m_valid):
    """conv1 + projection shortcut fused: one HBM read of x, one affine pass,
    one wide matmul (w = [w_conv1 | w_shortcut]).  Stats cover the conv1 half;
    the shortcut half is written out as f32 (exact residual add)."""
    a = _affine_relu(x_ref, s_ref, b_ref, m_valid)
    y = jnp.dot(a.astype(jnp.bfloat16), w_ref[...],
                preferred_element_type=jnp.float32)
    c1w = o1_ref.shape[1]
    y1 = y[:, :c1w]
    o1_ref[...] = y1.astype(o1_ref.dtype)
    o2_ref[...] = y[:, c1w:].astype(o2_ref.dtype)
    st_ref[0, 0:1, :] = jnp.sum(y1, axis=0, keepdims=True)
    st_ref[0, 1:2, :] = jnp.sum(y1 * y1, axis=0, keepdims=True)


def _conv3x3_kernel(xp_ref, m_ref, s_ref, b_ref, w_ref, o_ref, st_ref,
                    *, stride, th):
    """Row-tiled 3x3 conv (pad=1) of relu(x*scale+shift) + bn3 partial stats.

    xp_ref : (1, Hp, Wp, C)      bf16 zero-padded image (VMEM-resident per n)
    m_ref  : (1, Hp, Wp, 1)      f32 halo mask (0 on the 1-pixel border)
    s_ref  : (1, C)              f32 bn scale
    b_ref  : (1, C)              f32 bn shift
    w_ref  : (3, 3*C, Cout)      bf16 weights, kw-major im2col layout per kh
    o_ref  : (1, th, Wo, Cout)   bf16 output row tile
    st_ref : (1, 1, 2, Cout)     f32 per-tile (sum, sum_sq)
    """
    t = pl.program_id(1)
    C = xp_ref.shape[3]
    Wo, Cout = o_ref.shape[2], o_ref.shape[3]
    wh = (th - 1) * stride + 3            # padded rows needed by this row tile
    r0 = t * (th * stride)                # first padded row of the window

    xw = xp_ref[0, pl.ds(r0, wh), :, :].astype(jnp.float32)     # (wh, Wp, C)
    mw = m_ref[0, pl.ds(r0, wh), :, :]                          # (wh, Wp, 1)
    # BN affine + ReLU on the VPU; padded ring forced back to exact zero so it
    # matches "relu(bn(x)) then zero-pad" semantics.
    a = jnp.maximum(xw * s_ref[0] + b_ref[0], 0.0) * mw

    if stride == 2:
        # W de-interleave done ONCE (2 strided relayouts) instead of per tap.
        a_even = a[:, 0::2, :]
        a_odd = a[:, 1::2, :]

    # Value accumulation across the 3 kh taps (no VMEM scratch RMW); the 3 kw
    # taps per kh are fused into a single K=3*C matmul (im2col along kw only).
    acc = None
    for kh in range(3):
        if stride == 1:
            rows = a[kh: kh + th]                               # (th, Wp, C)
            cols = jnp.concatenate(
                [rows[:, 0:Wo], rows[:, 1:Wo + 1], rows[:, 2:Wo + 2]], axis=-1)
        else:
            hsl = slice(kh, kh + (th - 1) * 2 + 1, 2)
            re_, ro_ = a_even[hsl], a_odd[hsl]                  # (th, ~Wp/2, C)
            cols = jnp.concatenate(
                [re_[:, 0:Wo], ro_[:, 0:Wo], re_[:, 1:Wo + 1]], axis=-1)
        # TODO(synk): cast `a` to bf16 once before the loop and slice the packed
        # value directly once packed-dtype offset slicing is confirmed to lower
        # on the target Mosaic version; f32 slices/concat here is the proven path.
        part = jnp.dot(cols.reshape(th * Wo, 3 * C).astype(jnp.bfloat16),
                       w_ref[kh], preferred_element_type=jnp.float32)
        acc = part if acc is None else acc + part

    o_ref[...] = acc.reshape(1, th, Wo, Cout).astype(o_ref.dtype)
    st_ref[0, 0, 0:1, :] = jnp.sum(acc, axis=0, keepdims=True)
    st_ref[0, 0, 1:2, :] = jnp.sum(acc * acc, axis=0, keepdims=True)


# ----------------------------------------------------------------------------
# Pallas wrappers
# ----------------------------------------------------------------------------
def _m_tiling(M, cin, cout):
    """Row tiling for the 1x1 matmuls: as large as the generation cap / VMEM
    budget allows, cdiv-balanced blocks (padded tail rows are masked)."""
    per_row = 2 * (cin * 4 + cout * 4)            # double-buffered in + out
    fixed = 2 * cin * cout * 2 + (1 << 20)        # bf16 weights (x2) + slack
    budget = max(VMEM_LIMIT - fixed, 4 << 20)
    cap = max(8, min(M_TILE_CAP, (budget // per_row) // 8 * 8))
    nb = -(-M // cap)
    tm = _round_up(-(-M // nb), 8)
    return tm, tm * nb, nb


def preact_conv1x1(x2d, scale, shift, w, *, mode="plain", shortcut=None,
                   split=None, out_dtype=jnp.float32):
    """Fused BN-affine + ReLU + 1x1 conv kernels.  x2d: (M, Cin), w: (Cin, Cout).

    mode="plain": out
    mode="stats": (bf16 out, (nb, 2, Cout) per-block (sum, sum_sq))
    mode="fused": w = [w_conv1 | w_shortcut]; (bf16 conv1 out (M, split),
                  f32 shortcut out (M, Cout-split), stats over the conv1 half)
    mode="add":   f32 out = relu(x*s+b) @ w + shortcut
    """
    M, Cin = x2d.shape
    Cout = w.shape[1]
    tm, M_pad, nb = _m_tiling(M, Cin, Cout)
    if M_pad > M:
        x2d = jnp.pad(x2d, ((0, M_pad - M), (0, 0)))
        if shortcut is not None:
            shortcut = jnp.pad(shortcut, ((0, M_pad - M), (0, 0)))
    m_valid = M if M_pad > M else None

    s2 = scale.reshape(1, Cin).astype(jnp.float32)
    b2 = shift.reshape(1, Cin).astype(jnp.float32)
    x_spec = pl.BlockSpec((tm, Cin), lambda i: (i, 0))
    vec_spec = pl.BlockSpec((1, Cin), lambda i: (0, 0))
    w_spec = pl.BlockSpec((Cin, Cout), lambda i: (0, 0))
    row_spec = lambda c: pl.BlockSpec((tm, c), lambda i: (i, 0))
    st_spec = lambda c: pl.BlockSpec((1, 2, c), lambda i: (i, 0, 0))
    cp = pltpu.CompilerParams(dimension_semantics=("parallel",),
                              vmem_limit_bytes=VMEM_LIMIT)

    if mode == "plain":
        out = pl.pallas_call(
            _mm_plain_kernel,
            out_shape=jax.ShapeDtypeStruct((M_pad, Cout), out_dtype),
            grid=(nb,), in_specs=[x_spec, vec_spec, vec_spec, w_spec],
            out_specs=row_spec(Cout), compiler_params=cp)(x2d, s2, b2, w)
        return out[:M]

    if mode == "add":
        out = pl.pallas_call(
            _mm_add_kernel,
            out_shape=jax.ShapeDtypeStruct((M_pad, Cout), jnp.float32),
            grid=(nb,),
            in_specs=[x_spec, vec_spec, vec_spec, w_spec, row_spec(Cout)],
            out_specs=row_spec(Cout),
            compiler_params=cp)(x2d, s2, b2, w, shortcut)
        return out[:M]

    if mode == "stats":
        out, st = pl.pallas_call(
            functools.partial(_mm_stats_kernel, m_valid=m_valid),
            out_shape=(jax.ShapeDtypeStruct((M_pad, Cout), jnp.bfloat16),
                       jax.ShapeDtypeStruct((nb, 2, Cout), jnp.float32)),
            grid=(nb,), in_specs=[x_spec, vec_spec, vec_spec, w_spec],
            out_specs=(row_spec(Cout), st_spec(Cout)),
            compiler_params=cp)(x2d, s2, b2, w)
        return out[:M], st

    assert mode == "fused" and split is not None
    c1w, c2w = split, Cout - split
    o1, o2, st = pl.pallas_call(
        functools.partial(_mm_fused_kernel, m_valid=m_valid),
        out_shape=(jax.ShapeDtypeStruct((M_pad, c1w), jnp.bfloat16),
                   jax.ShapeDtypeStruct((M_pad, c2w), jnp.float32),
                   jax.ShapeDtypeStruct((nb, 2, c1w), jnp.float32)),
        grid=(nb,), in_specs=[x_spec, vec_spec, vec_spec, w_spec],
        out_specs=(row_spec(c1w), row_spec(c2w), st_spec(c1w)),
        compiler_params=cp)(x2d, s2, b2, w)
    return o1[:M], o2[:M], st


def _pick_row_tile(ho, wo, hp, wp, c, cout, stride):
    """Largest divisor of Ho with th*Wo <= ROW_CAP whose per-tile working set
    (activated window, im2col block, f32 acc, double-buffered output) fits the
    generation-aware VMEM budget after the fixed image/weight/mask buffers."""
    fixed = 2 * hp * wp * c * 2 + 2 * 9 * c * cout * 2 + 2 * hp * wp * 4 + (1 << 20)
    budget = max(VMEM_LIMIT - fixed, 1 << 20)
    for th in range(ho, 0, -1):
        if ho % th or th * wo > ROW_CAP:
            continue
        wh = (th - 1) * stride + 3
        work = (wh * wp * c * 4            # f32 activated window
                + th * wo * 3 * c * 4      # f32 im2col block (one kh at a time)
                + th * wo * cout * 4       # f32 value accumulator
                + 2 * th * wo * cout * 2   # double-buffered bf16 output
                + 4 * cout * 4)            # stats
        if work <= budget:
            return th
    return 1


def preact_conv3x3(x_nhwc, scale, shift, w3c, stride):
    """3x3, pad=1, `stride` conv of relu(x*scale+shift), row-tiled, + bn3
    partial statistics.  x_nhwc: (N,H,W,C) bf16; w3c: (3, 3*C, Cout) bf16.
    Returns (out (N,Ho,Wo,Cout) bf16, stats (N, n_t, 2, Cout) f32)."""
    N, H, W, C = x_nhwc.shape
    Cout = w3c.shape[-1]
    Ho = (H - 1) // stride + 1
    Wo = (W - 1) // stride + 1
    Hp, Wp = H + 2, W + 2
    th = _pick_row_tile(Ho, Wo, Hp, Wp, C, Cout, stride)
    n_t = Ho // th

    xp = jnp.pad(x_nhwc, ((0, 0), (1, 1), (1, 1), (0, 0)))
    # 0/1 halo mask, built once in the wrapper (single vmul per tile in-kernel).
    mask = (jnp.zeros((Hp, Wp), jnp.float32).at[1:Hp - 1, 1:Wp - 1].set(1.0)
            .reshape(1, Hp, Wp, 1))
    s2 = scale.reshape(1, C).astype(jnp.float32)
    b2 = shift.reshape(1, C).astype(jnp.float32)

    kernel = functools.partial(_conv3x3_kernel, stride=stride, th=th)
    return pl.pallas_call(
        kernel,
        out_shape=(jax.ShapeDtypeStruct((N, Ho, Wo, Cout), jnp.bfloat16),
                   jax.ShapeDtypeStruct((N, n_t, 2, Cout), jnp.float32)),
        grid=(N, n_t),
        in_specs=[
            pl.BlockSpec((1, Hp, Wp, C), lambda n, t: (n, 0, 0, 0)),
            pl.BlockSpec((1, Hp, Wp, 1), lambda n, t: (0, 0, 0, 0)),
            pl.BlockSpec((1, C), lambda n, t: (0, 0)),
            pl.BlockSpec((1, C), lambda n, t: (0, 0)),
            pl.BlockSpec((3, 3 * C, Cout), lambda n, t: (0, 0, 0)),
        ],
        out_specs=(
            pl.BlockSpec((1, th, Wo, Cout), lambda n, t: (n, t, 0, 0)),
            pl.BlockSpec((1, 1, 2, Cout), lambda n, t: (n, t, 0, 0)),
        ),
        compiler_params=pltpu.CompilerParams(
            dimension_semantics=("parallel", "parallel"),
            vmem_limit_bytes=VMEM_LIMIT),
    )(xp, mask, s2, b2, w3c)


# ----------------------------------------------------------------------------
# Module
# ----------------------------------------------------------------------------
class PreActBottleneckPallas:
    expansion = 4

    def __init__(self, in_planes, planes, stride=1, key=None):
        self.in_planes, self.planes, self.stride = in_planes, planes, stride
        outp = self.expansion * planes
        self.has_shortcut = (stride != 1) or (in_planes != outp)

        ks = jax.random.split(key, 12)
        nrm = lambda k, shp, sc=0.1: sc * jax.random.normal(k, shp, jnp.float32)
        # BatchNorm affine params (random perturbations so the affine is exercised).
        self.g1 = 1.0 + nrm(ks[0], (in_planes,)); self.be1 = nrm(ks[1], (in_planes,))
        self.g2 = 1.0 + nrm(ks[2], (planes,));    self.be2 = nrm(ks[3], (planes,))
        self.g3 = 1.0 + nrm(ks[4], (planes,));    self.be3 = nrm(ks[5], (planes,))
        # Conv weights in PyTorch OIHW layout (used by the pure-JAX reference).
        self.w1 = nrm(ks[6], (planes, in_planes, 1, 1))
        self.w2 = nrm(ks[7], (planes, planes, 3, 3))
        self.w3 = nrm(ks[8], (outp, planes, 1, 1))
        self.ws = nrm(ks[9], (outp, in_planes, 1, 1)) if self.has_shortcut else None

        # ---- kernel-friendly, lane-padded (multiple-of-128) bf16 layouts -----
        self.cin_p = _round_up(in_planes, LANE)
        self.p_p = _round_up(planes, LANE)
        self.co_p = _round_up(outp, LANE)

        def pad2(a, r, c):
            return jnp.zeros((r, c), jnp.float32).at[:a.shape[0], :a.shape[1]].set(a)

        def pad1(v, n, fill):
            return jnp.concatenate([v, jnp.full((n - v.shape[0],), fill, v.dtype)])

        self.w1_mat = pad2(self.w1[:, :, 0, 0].T, self.cin_p, self.p_p).astype(jnp.bfloat16)
        w2_kkio = jnp.transpose(self.w2, (2, 3, 1, 0))                 # (kh,kw,Cin,Cout)
        w2_pad = (jnp.zeros((3, 3, self.p_p, self.p_p), jnp.float32)
                  .at[:, :, :planes, :planes].set(w2_kkio))
        # kw-major im2col weight layout: per kh a (3*Cin, Cout) matrix.
        self.w2_3c = w2_pad.reshape(3, 3 * self.p_p, self.p_p).astype(jnp.bfloat16)
        self.w3_mat = pad2(self.w3[:, :, 0, 0].T, self.p_p, self.co_p).astype(jnp.bfloat16)
        if self.has_shortcut:
            self.ws_mat = pad2(self.ws[:, :, 0, 0].T, self.cin_p, self.co_p).astype(jnp.bfloat16)
            if stride == 1:
                # conv1 and the projection shortcut share relu(bn1(x)): fuse them
                # into one wide matmul by concatenating weights along Cout.
                self.w1s_cat = jnp.concatenate([self.w1_mat, self.ws_mat], axis=1)
        # Padded channels get gamma=1 / beta=0; their activations stay exactly 0
        # (zero inputs + zero-variance stats => shift 0) and hit zero weight rows.
        self.g1p = pad1(self.g1, self.cin_p, 1.0); self.be1p = pad1(self.be1, self.cin_p, 0.0)
        self.g2p = pad1(self.g2, self.p_p, 1.0);   self.be2p = pad1(self.be2, self.p_p, 0.0)
        self.g3p = pad1(self.g3, self.p_p, 1.0);   self.be3p = pad1(self.be3, self.p_p, 0.0)

    @staticmethod
    def _fold(total, count, gamma, beta):
        """Fold (sum, sum_sq) partials + affine params into per-channel scale/shift."""
        mean = total[0] / count
        var = jnp.maximum(total[1] / count - mean * mean, 0.0)   # biased (training BN)
        scale = gamma / jnp.sqrt(var + EPS)
        return scale, beta - mean * scale

    def __call__(self, x_nchw):
        N, Cin, H, W = x_nchw.shape
        s = self.stride
        outp = self.expansion * self.planes

        # bn1 training-mode stats straight on the NCHW input (one fused pass),
        # then a single transpose + lane-pad materialization of x in f32.  That
        # f32 copy also serves as the identity shortcut -> f32-exact residual add.
        m1 = jnp.pad(jnp.mean(x_nchw, axis=(0, 2, 3)), (0, self.cin_p - Cin))
        v1 = jnp.pad(jnp.var(x_nchw, axis=(0, 2, 3)), (0, self.cin_p - Cin))
        s1 = self.g1p / jnp.sqrt(v1 + EPS)
        b1 = self.be1p - m1 * s1
        xf = jnp.pad(jnp.transpose(x_nchw, (0, 2, 3, 1)).astype(jnp.float32),
                     ((0, 0), (0, 0), (0, 0), (0, self.cin_p - Cin)))
        M = N * H * W

        # --- conv1 (1x1) [+ fused projection shortcut] + bn2 partial stats -----
        if self.has_shortcut and s == 1:
            c1, sc, st1 = preact_conv1x1(xf.reshape(M, self.cin_p), s1, b1,
                                         self.w1s_cat, mode="fused",
                                         split=self.p_p)
        else:
            c1, st1 = preact_conv1x1(xf.reshape(M, self.cin_p), s1, b1,
                                     self.w1_mat, mode="stats")
            if self.has_shortcut:                       # stride-2 projection
                xs = xf[:, ::s, ::s, :]                 # stride on the 1x1 conv
                Ms = N * xs.shape[1] * xs.shape[2]
                sc = preact_conv1x1(xs.reshape(Ms, self.cin_p), s1, b1,
                                    self.ws_mat, mode="plain",
                                    out_dtype=jnp.float32)
            else:
                sc = xf.reshape(M, self.cin_p)          # identity shortcut (f32)
        s2, b2 = self._fold(st1.sum(axis=0), M, self.g2p, self.be2p)

        # --- conv2 (3x3, stride) with fused bn3 partial statistics -------------
        c2, st2 = preact_conv3x3(c1.reshape(N, H, W, self.p_p), s2, b2,
                                 self.w2_3c, s)
        Ho, Wo = c2.shape[1], c2.shape[2]
        M2 = N * Ho * Wo
        s3, b3 = self._fold(st2.sum(axis=(0, 1)), M2, self.g3p, self.be3p)

        # --- conv3 (1x1) + residual add, f32 output -----------------------------
        out = preact_conv1x1(c2.reshape(M2, self.p_p), s3, b3, self.w3_mat,
                             mode="add", shortcut=sc)
        out = out.reshape(N, Ho, Wo, self.co_p)[:, :, :, :outp]
        return jnp.transpose(out, (0, 3, 1, 2))                          # NCHW

    # Pure-JAX f32 reference mirroring the PyTorch forward (NCHW, training-mode BN).
    def reference(self, x):
        def bn(t, g, b):
            m = t.mean(axis=(0, 2, 3), keepdims=True)
            v = t.var(axis=(0, 2, 3), keepdims=True)
            return (t - m) / jnp.sqrt(v + EPS) * g.reshape(1, -1, 1, 1) \
                   + b.reshape(1, -1, 1, 1)

        def conv(t, w, stride=1, pad=0):
            return jax.lax.conv_general_dilated(
                t, w, (stride, stride), [(pad, pad), (pad, pad)],
                dimension_numbers=("NCHW", "OIHW", "NCHW"))

        out = jax.nn.relu(bn(x, self.g1, self.be1))
        shortcut = conv(out, self.ws, self.stride) if self.has_shortcut else x
        out = conv(out, self.w1)
        out = conv(jax.nn.relu(bn(out, self.g2, self.be2)), self.w2, self.stride, 1)
        out = conv(jax.nn.relu(bn(out, self.g3, self.be3)), self.w3)
        return out + shortcut


if __name__ == "__main__":
    key = jax.random.PRNGKey(0)
    configs = [
        # (in_planes, planes, stride, N, H, W)
        (16, 8, 1, 2, 16, 16),   # projection shortcut, stride 1 (fused conv1+shortcut)
        (32, 8, 2, 2, 16, 16),   # projection shortcut, stride 2
        (32, 8, 1, 2, 16, 16),   # identity shortcut
    ]
    for idx, (cin, p, s, n, h, w) in enumerate(configs):
        k = jax.random.fold_in(key, idx)
        block = PreActBottleneckPallas(cin, p, stride=s, key=k)
        x = jax.random.normal(jax.random.fold_in(k, 1234), (n, cin, h, w),
                              jnp.float32)
        out = jax.block_until_ready(block(x))
        ref = jax.block_until_ready(block.reference(x))
        assert out.shape == ref.shape, (out.shape, ref.shape)
        if not bool(jnp.allclose(out, ref, atol=5e-2, rtol=5e-2)):
            max_err = float(jnp.max(jnp.abs(out - ref)))
            raise AssertionError(
                f"config {idx} {(cin, p, s)}: mismatch vs reference, "
                f"max|err|={max_err}")
    print("KERNEL_OK")
</pallas_src>

<mosaic_0001>
module attributes {stable_mosaic.version = 11 : i64} {
  func.func @_mm_fused_kernel(%arg0: i32, %arg1: memref<512x128xf32, #tpu.memory_space<vmem>>, %arg2: memref<1x128xf32, #tpu.memory_space<vmem>>, %arg3: memref<1x128xf32, #tpu.memory_space<vmem>>, %arg4: memref<128x256xbf16, #tpu.memory_space<vmem>>, %arg5: memref<512x128xbf16, #tpu.memory_space<vmem>>, %arg6: memref<512x128xf32, #tpu.memory_space<vmem>>, %arg7: memref<1x2x128xf32, #tpu.memory_space<vmem>>) attributes {dimension_semantics = [#tpu.dimension_semantics<parallel>], iteration_bounds = array<i64: 1>, scalar_prefetch = 0 : i64, scratch_operands = 0 : i64, tpu.core_type = #tpu.core_type<tc>, window_params = [{transform_indices = @transform_0, window_bounds = array<i64: 512, 128>}, {pipeline_mode = #tpu.pipeline_mode<synchronous>, transform_indices = @transform_1, window_bounds = array<i64: 1, 128>}, {pipeline_mode = #tpu.pipeline_mode<synchronous>, transform_indices = @transform_2, window_bounds = array<i64: 1, 128>}, {pipeline_mode = #tpu.pipeline_mode<synchronous>, transform_indices = @transform_3, window_bounds = array<i64: 128, 256>}, {transform_indices = @transform_4, window_bounds = array<i64: 512, 128>}, {transform_indices = @transform_5, window_bounds = array<i64: 512, 128>}, {transform_indices = @transform_6, window_bounds = array<i64: 1, 2, 128>}]} {
    %c0 = arith.constant 0 : index
    %c0_0 = arith.constant 0 : index
    %0 = vector.load %arg1[%c0, %c0_0] : memref<512x128xf32, #tpu.memory_space<vmem>>, vector<512x128xf32>
    %c0_1 = arith.constant 0 : index
    %c0_2 = arith.constant 0 : index
    %1 = vector.load %arg2[%c0_1, %c0_2] : memref<1x128xf32, #tpu.memory_space<vmem>>, vector<1x128xf32>
    %2 = vector.broadcast %1 : vector<1x128xf32> to vector<512x128xf32>
    %3 = arith.mulf %0, %2 : vector<512x128xf32>
    %c0_3 = arith.constant 0 : index
    %c0_4 = arith.constant 0 : index
    %4 = vector.load %arg3[%c0_3, %c0_4] : memref<1x128xf32, #tpu.memory_space<vmem>>, vector<1x128xf32>
    %5 = vector.broadcast %4 : vector<1x128xf32> to vector<512x128xf32>
    %6 = arith.addf %3, %5 : vector<512x128xf32>
    %cst = arith.constant 0.000000e+00 : f32
    %7 = vector.broadcast %cst : f32 to vector<512x128xf32>
    %8 = arith.maximumf %6, %7 : vector<512x128xf32>
    %9 = arith.truncf %8 : vector<512x128xf32> to vector<512x128xbf16>
    %c0_5 = arith.constant 0 : index
    %c0_6 = arith.constant 0 : index
    %10 = vector.load %arg4[%c0_5, %c0_6] : memref<128x256xbf16, #tpu.memory_space<vmem>>, vector<128x256xbf16>
    %cst_7 = arith.constant dense<0.000000e+00> : vector<512x256xf32>
    %11 = tpu.matmul %9, %10, %cst_7 {dimension_numbers = #tpu.dot_dimension_numbers<[1], [0], [0], [1], [0, 0, 1, 1], [], []>} : vector<512x128xbf16>, vector<128x256xbf16>, vector<512x256xf32> -> vector<512x256xf32>
    %12 = vector.extract_strided_slice %11 {offsets = [0, 0], sizes = [512, 128], strides = [1, 1]} : vector<512x256xf32> to vector<512x128xf32>
    %13 = arith.truncf %12 : vector<512x128xf32> to vector<512x128xbf16>
    %c0_8 = arith.constant 0 : index
    %c0_9 = arith.constant 0 : index
    %14 = vector.load %arg5[%c0_8, %c0_9] : memref<512x128xbf16, #tpu.memory_space<vmem>>, vector<512x128xbf16>
    tpu.vector_store %arg5[%c0_8, %c0_9], %13 {strides = array<i32>} : memref<512x128xbf16, #tpu.memory_space<vmem>>, vector<512x128xbf16>,
    %15 = vector.extract_strided_slice %11 {offsets = [0, 128], sizes = [512, 128], strides = [1, 1]} : vector<512x256xf32> to vector<512x128xf32>
    %c0_10 = arith.constant 0 : index
    %c0_11 = arith.constant 0 : index
    %16 = vector.load %arg6[%c0_10, %c0_11] : memref<512x128xf32, #tpu.memory_space<vmem>>, vector<512x128xf32>
    tpu.vector_store %arg6[%c0_10, %c0_11], %15 {strides = array<i32>} : memref<512x128xf32, #tpu.memory_space<vmem>>, vector<512x128xf32>,
    %cst_12 = arith.constant dense<0.000000e+00> : vector<128xf32>
    %17 = vector.multi_reduction <add>, %12, %cst_12 [0] : vector<512x128xf32> to vector<128xf32>
    %18 = vector.shape_cast %17 : vector<128xf32> to vector<1x128xf32>
    %c0_13 = arith.constant 0 : index
    %c0_14 = arith.constant 0 : index
    %c0_15 = arith.constant 0 : index
    %19 = vector.load %arg7[%c0_13, %c0_14, %c0_15] : memref<1x2x128xf32, #tpu.memory_space<vmem>>, vector<1x1x128xf32>
    %20 = vector.shape_cast %19 : vector<1x1x128xf32> to vector<1x128xf32>
    %21 = vector.shape_cast %18 : vector<1x128xf32> to vector<1x1x128xf32>
    tpu.vector_store %arg7[%c0_13, %c0_14, %c0_15], %21 {strides = array<i32>} : memref<1x2x128xf32, #tpu.memory_space<vmem>>, vector<1x1x128xf32>,
    %22 = arith.mulf %12, %12 : vector<512x128xf32>
    %cst_16 = arith.constant dense<0.000000e+00> : vector<128xf32>
    %23 = vector.multi_reduction <add>, %22, %cst_16 [0] : vector<512x128xf32> to vector<128xf32>
    %24 = vector.shape_cast %23 : vector<128xf32> to vector<1x128xf32>
    %c0_17 = arith.constant 0 : index
    %c1 = arith.constant 1 : index
    %c0_18 = arith.constant 0 : index
    %25 = vector.load %arg7[%c0_17, %c1, %c0_18] : memref<1x2x128xf32, #tpu.memory_space<vmem>>, vector<1x1x128xf32>
    %26 = vector.shape_cast %25 : vector<1x1x128xf32> to vector<1x128xf32>
    %27 = vector.shape_cast %24 : vector<1x128xf32> to vector<1x1x128xf32>
    tpu.vector_store %arg7[%c0_17, %c1, %c0_18], %27 {strides = array<i32>} : memref<1x2x128xf32, #tpu.memory_space<vmem>>, vector<1x1x128xf32>,
    return
  }
  func.func @transform_0(%arg0: i32) -> (i32, i32) {
    %c0_i32 = arith.constant 0 : i32
    %c0_i32_0 = arith.constant 0 : i32
    return %arg0, %c0_i32 : i32, i32
  }
  func.func @transform_1(%arg0: i32) -> (i32, i32) {
    %c0_i32 = arith.constant 0 : i32
    %c0_i32_0 = arith.constant 0 : i32
    %c0_i32_1 = arith.constant 0 : i32
    return %c0_i32, %c0_i32_0 : i32, i32
  }
  func.func @transform_2(%arg0: i32) -> (i32, i32) {
    %c0_i32 = arith.constant 0 : i32
    %c0_i32_0 = arith.constant 0 : i32
    %c0_i32_1 = arith.constant 0 : i32
    return %c0_i32, %c0_i32_0 : i32, i32
  }
  func.func @transform_3(%arg0: i32) -> (i32, i32) {
    %c0_i32 = arith.constant 0 : i32
    %c0_i32_0 = arith.constant 0 : i32
    %c0_i32_1 = arith.constant 0 : i32
    return %c0_i32, %c0_i32_0 : i32, i32
  }
  func.func @transform_4(%arg0: i32) -> (i32, i32) {
    %c0_i32 = arith.constant 0 : i32
    %c0_i32_0 = arith.constant 0 : i32
    return %arg0, %c0_i32 : i32, i32
  }
  func.func @transform_5(%arg0: i32) -> (i32, i32) {
    %c0_i32 = arith.constant 0 : i32
    %c0_i32_0 = arith.constant 0 : i32
    return %arg0, %c0_i32 : i32, i32
  }
  func.func @transform_6(%arg0: i32) -> (i32, i32, i32) {
    %c0_i32 = arith.constant 0 : i32
    %c0_i32_0 = arith.constant 0 : i32
    %c0_i32_1 = arith.constant 0 : i32
    return %arg0, %c0_i32, %c0_i32_0 : i32, i32, i32
  }
}

</mosaic_0001>

<llo_original>
// kernel: tpu_custom_call.1
$region0: #{tpu_custom_call.1}
  #allocation0 [shape = 'u32[]', space=smem, size = 0x4, offset = 0x4, fixed_abs, tag = 'smem constant byte address 0x4 - core index']
  #allocation1 [shape = 'u32[144,128]{1,0:T(1,128)}', space=vmem, size = 0x12000, scoped, tag = 'internal scratch']
  %s0 = inlined_call_operand.hbm [shape: f32[512,128], index: 0, kind: input, shape index: {}]
  %s1 = inlined_call_operand.vmem [shape: f32[1,128], index: 1, kind: input, shape index: {}]
  %s2 = inlined_call_operand.vmem [shape: f32[1,128], index: 2, kind: input, shape index: {}]
  %s3 = inlined_call_operand.hbm [shape: bf16[128,256], index: 3, kind: input, shape index: {}]
  %s4 = inlined_call_operand.hbm [shape: bf16[512,128], index: 4, kind: output, shape index: {0}]
  %s5 = inlined_call_operand.hbm [shape: f32[512,128], index: 5, kind: output, shape index: {1}]
  %s6 = inlined_call_operand.hbm [shape: f32[1,2,128], index: 6, kind: output, shape index: {2}]
  %7 = xla_tuple %s4, %s5, %s6
  %s8 = sld [smem:[#allocation0]]
  $region50: #{tpu_custom_call.1} parent=0
    _
  %s10 = ssub.s32 1, %s8
  %s11 = scalar_select 0, %s10, %s8
  $region1: #{tpu_custom_call.1} parent=0
    #allocation2 [shape = 'u8[262144]{0}', space=vmem, size = 0x40000, scoped, tag = 'input window, operand 0, single buffered']
    #allocation3 [shape = 's32[1]{0}', space=sflag, size = 0x4, scoped, tag = 'scoped memory for tpu_custom_call.1']
    #allocation4 [shape = 's32[1]{0}', space=sflag, size = 0x4, scoped, tag = 'scoped memory for tpu_custom_call.1']
    #allocation5 [shape = 'u8[65536]{0}', space=vmem, size = 0x10000, scoped, tag = 'input window, operand 3, single buffered']
    #allocation6 [shape = 's32[1]{0}', space=sflag, size = 0x4, scoped, tag = 'scoped memory for tpu_custom_call.1']
    #allocation7 [shape = 'u8[131072]{0}', space=vmem, size = 0x20000, scoped, tag = 'output window, operand 0, single buffered']
    #allocation8 [shape = 'u8[262144]{0}', space=vmem, size = 0x40000, scoped, tag = 'output window, operand 1, single buffered']
    #allocation9 [shape = 's32[1]{0}', space=sflag, size = 0x4, scoped, tag = 'scoped memory for tpu_custom_call.1']
    #allocation10 [shape = 'u8[1024]{0}', space=vmem, size = 0x400, scoped, tag = 'output window, operand 2, single buffered']
    %12 = vsyncpa [#allocation3], 0
    %13 = vsyncpa [#allocation6], 0
    %14 = vsyncpa [#allocation4], 0
    %15 = vsyncpa [#allocation9], 0
    // Predicated region
    $region2: #{tpu_custom_call.1} parent=1 // pred_check
      _
    $region3: #{tpu_custom_call.1} parent=1 // pred_check_branch
      %17 = sbr.rel (0) target = $region5
    $region4: #{tpu_custom_call.1} parent=1 // pred_region
      %s19 = ssub.s32 8192, 8192
      %20 = vsyncadd [#allocation3], %s19
      %s21 = sshll.u32 [#allocation2], 4
      %s22 = int_to_ptr.vmem [resolvable:$true] %s21
      %27 = dma.hbm_to_vmem [thread:$0]  %s0, 8192, %s22, [#allocation3], 128, 128, 8
    $region5: #{tpu_custom_call.1} parent=1 // pred_fallthru
      _
    // Predicated region
    $region6: #{tpu_custom_call.1} parent=1 // pred_check
      _
    $region7: #{tpu_custom_call.1} parent=1 // pred_check_branch
      %29 = sbr.rel (0) target = $region9
    $region8: #{tpu_custom_call.1} parent=1 // pred_region
      _
    $region9: #{tpu_custom_call.1} parent=1 // pred_fallthru
      _
    // Predicated region
    $region10: #{tpu_custom_call.1} parent=1 // pred_check
      _
    $region11: #{tpu_custom_call.1} parent=1 // pred_check_branch
      %31 = sbr.rel (0) target = $region13
    $region12: #{tpu_custom_call.1} parent=1 // pred_region
      _
    $region13: #{tpu_custom_call.1} parent=1 // pred_fallthru
      _
    // Predicated region
    $region14: #{tpu_custom_call.1} parent=1 // pred_check
      _
    $region15: #{tpu_custom_call.1} parent=1 // pred_check_branch
      %33 = sbr.rel (0) target = $region17
    $region16: #{tpu_custom_call.1} parent=1 // pred_region
      %s35 = ssub.s32 2048, 2048
      %36 = vsyncadd [#allocation6], %s35
      %s37 = sshll.u32 [#allocation5], 4
      %s38 = int_to_ptr.vmem [resolvable:$true] %s37
      %43 = dma.hbm_to_vmem [thread:$0]  %s3, 2048, %s38, [#allocation6], 128, 128, 8
    $region17: #{tpu_custom_call.1} parent=1 // pred_fallthru
      _
    // Predicated region
    $region18: #{tpu_custom_call.1} parent=1 // pred_check
      _
    $region19: #{tpu_custom_call.1} parent=1 // pred_check_branch
      %45 = sbr.rel (0) target = $region21
    $region20: #{tpu_custom_call.1} parent=1 // pred_region
      %46 = dma.done [#allocation3], 8192
    $region21: #{tpu_custom_call.1} parent=1 // pred_fallthru
      _
    // Predicated region
    $region22: #{tpu_custom_call.1} parent=1 // pred_check
      _
    $region23: #{tpu_custom_call.1} parent=1 // pred_check_branch
      %48 = sbr.rel (0) target = $region25
    $region24: #{tpu_custom_call.1} parent=1 // pred_region
      %49 = dma.done [#allocation6], 2048
    $region25: #{tpu_custom_call.1} parent=1 // pred_fallthru
      _
    %v51 = vld [vmem:[#allocation2] sm:$0xff]
    %v52 = vld [vmem:[#allocation2 + $0x8] sm:$0xff]
    %v53 = vld [vmem:[#allocation2 + $0x10] sm:$0xff]
    %v54 = vld [vmem:[#allocation2 + $0x18] sm:$0xff]
    %v55 = vld [vmem:[#allocation2 + $0x20] sm:$0xff]
    %v56 = vld [vmem:[#allocation2 + $0x28] sm:$0xff]
    %v57 = vld [vmem:[#allocation2 + $0x30] sm:$0xff]
    %v58 = vld [vmem:[#allocation2 + $0x38] sm:$0xff]
    %v59 = vld [vmem:[#allocation2 + $0x40] sm:$0xff]
    %v60 = vld [vmem:[#allocation2 + $0x48] sm:$0xff]
    %v61 = vld [vmem:[#allocation2 + $0x50] sm:$0xff]
    %v62 = vld [vmem:[#allocation2 + $0x58] sm:$0xff]
    %v63 = vld [vmem:[#allocation2 + $0x60] sm:$0xff]
    %v64 = vld [vmem:[#allocation2 + $0x68] sm:$0xff]
    %v65 = vld [vmem:[#allocation2 + $0x70] sm:$0xff]
    %v66 = vld [vmem:[#allocation2 + $0x78] sm:$0xff]
    %v67 = vld [vmem:[#allocation2 + $0x80] sm:$0xff]
    %v68 = vld [vmem:[#allocation2 + $0x88] sm:$0xff]
    %v69 = vld [vmem:[#allocation2 + $0x90] sm:$0xff]
    %v70 = vld [vmem:[#allocation2 + $0x98] sm:$0xff]
    %v71 = vld [vmem:[#allocation2 + $0xa0] sm:$0xff]
    %v72 = vld [vmem:[#allocation2 + $0xa8] sm:$0xff]
    %v73 = vld [vmem:[#allocation2 + $0xb0] sm:$0xff]
    %v74 = vld [vmem:[#allocation2 + $0xb8] sm:$0xff]
    %v75 = vld [vmem:[#allocation2 + $0xc0] sm:$0xff]
    %v76 = vld [vmem:[#allocation2 + $0xc8] sm:$0xff]
    %v77 = vld [vmem:[#allocation2 + $0xd0] sm:$0xff]
    %v78 = vld [vmem:[#allocation2 + $0xd8] sm:$0xff]
    %v79 = vld [vmem:[#allocation2 + $0xe0] sm:$0xff]
    %v80 = vld [vmem:[#allocation2 + $0xe8] sm:$0xff]
    %v81 = vld [vmem:[#allocation2 + $0xf0] sm:$0xff]
    %v82 = vld [vmem:[#allocation2 + $0xf8] sm:$0xff]
    %v83 = vld [vmem:[#allocation2 + $0x100] sm:$0xff]
    %v84 = vld [vmem:[#allocation2 + $0x108] sm:$0xff]
    %v85 = vld [vmem:[#allocation2 + $0x110] sm:$0xff]
    %v86 = vld [vmem:[#allocation2 + $0x118] sm:$0xff]
    %v87 = vld [vmem:[#allocation2 + $0x120] sm:$0xff]
    %v88 = vld [vmem:[#allocation2 + $0x128] sm:$0xff]
    %v89 = vld [vmem:[#allocation2 + $0x130] sm:$0xff]
    %v90 = vld [vmem:[#allocation2 + $0x138] sm:$0xff]
    %v91 = vld [vmem:[#allocation2 + $0x140] sm:$0xff]
    %v92 = vld [vmem:[#allocation2 + $0x148] sm:$0xff]
    %v93 = vld [vmem:[#allocation2 + $0x150] sm:$0xff]
    %v94 = vld [vmem:[#allocation2 + $0x158] sm:$0xff]
    %v95 = vld [vmem:[#allocation2 + $0x160] sm:$0xff]
    %v96 = vld [vmem:[#allocation2 + $0x168] sm:$0xff]
    %v97 = vld [vmem:[#allocation2 + $0x170] sm:$0xff]
    %v98 = vld [vmem:[#allocation2 + $0x178] sm:$0xff]
    %v99 = vld [vmem:[#allocation2 + $0x180] sm:$0xff]
    %v100 = vld [vmem:[#allocation2 + $0x188] sm:$0xff]
    %v101 = vld [vmem:[#allocation2 + $0x190] sm:$0xff]
    %v102 = vld [vmem:[#allocation2 + $0x198] sm:$0xff]
    %v103 = vld [vmem:[#allocation2 + $0x1a0] sm:$0xff]
    %v104 = vld [vmem:[#allocation2 + $0x1a8] sm:$0xff]
    %v105 = vld [vmem:[#allocation2 + $0x1b0] sm:$0xff]
    %v106 = vld [vmem:[#allocation2 + $0x1b8] sm:$0xff]
    %v107 = vld [vmem:[#allocation2 + $0x1c0] sm:$0xff]
    %v108 = vld [vmem:[#allocation2 + $0x1c8] sm:$0xff]
    %v109 = vld [vmem:[#allocation2 + $0x1d0] sm:$0xff]
    %v110 = vld [vmem:[#allocation2 + $0x1d8] sm:$0xff]
    %v111 = vld [vmem:[#allocation2 + $0x1e0] sm:$0xff]
    %v112 = vld [vmem:[#allocation2 + $0x1e8] sm:$0xff]
    %v113 = vld [vmem:[#allocation2 + $0x1f0] sm:$0xff]
    %v114 = vld [vmem:[#allocation2 + $0x1f8] sm:$0xff]
    %v115 = vld [vmem:[%s1] sm:$0x1]
    %v117 = vlaneseq
    %v118 = vshrl.u32 %v117, 7
    %v119 = vsub.s32 0, %v118
    %v120 = vrot.slane %v115, %v119
    %v122 = vmul.f32 %v51, %v120
    %v123 = vmul.f32 %v52, %v120
    %v124 = vmul.f32 %v53, %v120
    %v125 = vmul.f32 %v54, %v120
    %v126 = vmul.f32 %v55, %v120
    %v127 = vmul.f32 %v56, %v120
    %v128 = vmul.f32 %v57, %v120
    %v129 = vmul.f32 %v58, %v120
    %v130 = vmul.f32 %v59, %v120
    %v131 = vmul.f32 %v60, %v120
    %v132 = vmul.f32 %v61, %v120
    %v133 = vmul.f32 %v62, %v120
    %v134 = vmul.f32 %v63, %v120
    %v135 = vmul.f32 %v64, %v120
    %v136 = vmul.f32 %v65, %v120
    %v137 = vmul.f32 %v66, %v120
    %v138 = vmul.f32 %v67, %v120
    %v139 = vmul.f32 %v68, %v120
    %v140 = vmul.f32 %v69, %v120
    %v141 = vmul.f32 %v70, %v120
    %v142 = vmul.f32 %v71, %v120
    %v143 = vmul.f32 %v72, %v120
    %v144 = vmul.f32 %v73, %v120
    %v145 = vmul.f32 %v74, %v120
    %v146 = vmul.f32 %v75, %v120
    %v147 = vmul.f32 %v76, %v120
    %v148 = vmul.f32 %v77, %v120
    %v149 = vmul.f32 %v78, %v120
    %v150 = vmul.f32 %v79, %v120
    %v151 = vmul.f32 %v80, %v120
    %v152 = vmul.f32 %v81, %v120
    %v153 = vmul.f32 %v82, %v120
    %v154 = vmul.f32 %v83, %v120
    %v155 = vmul.f32 %v84, %v120
    %v156 = vmul.f32 %v85, %v120
    %v157 = vmul.f32 %v86, %v120
    %v158 = vmul.f32 %v87, %v120
    %v159 = vmul.f32 %v88, %v120
    %v160 = vmul.f32 %v89, %v120
    %v161 = vmul.f32 %v90, %v120
    %v162 = vmul.f32 %v91, %v120
    %v163 = vmul.f32 %v92, %v120
    %v164 = vmul.f32 %v93, %v120
    %v165 = vmul.f32 %v94, %v120
    %v166 = vmul.f32 %v95, %v120
    %v167 = vmul.f32 %v96, %v120
    %v168 = vmul.f32 %v97, %v120
    %v169 = vmul.f32 %v98, %v120
    %v170 = vmul.f32 %v99, %v120
    %v171 = vmul.f32 %v100, %v120
    %v172 = vmul.f32 %v101, %v120
    %v173 = vmul.f32 %v102, %v120
    %v174 = vmul.f32 %v103, %v120
    %v175 = vmul.f32 %v104, %v120
    %v176 = vmul.f32 %v105, %v120
    %v177 = vmul.f32 %v106, %v120
    %v178 = vmul.f32 %v107, %v120
    %v179 = vmul.f32 %v108, %v120
    %v180 = vmul.f32 %v109, %v120
    %v181 = vmul.f32 %v110, %v120
    %v182 = vmul.f32 %v111, %v120
    %v183 = vmul.f32 %v112, %v120
    %v184 = vmul.f32 %v113, %v120
    %v185 = vmul.f32 %v114, %v120
    %v186 = vld [vmem:[%s2] sm:$0x1]
    %v188 = vlaneseq
    %v189 = vshrl.u32 %v188, 7
    %v190 = vsub.s32 0, %v189
    %v191 = vrot.slane %v186, %v190
    %v193 = vadd.f32 %v122, %v191
    %v194 = vadd.f32 %v123, %v191
    %v195 = vadd.f32 %v124, %v191
    %v196 = vadd.f32 %v125, %v191
    %v197 = vadd.f32 %v126, %v191
    %v198 = vadd.f32 %v127, %v191
    %v199 = vadd.f32 %v128, %v191
    %v200 = vadd.f32 %v129, %v191
    %v201 = vadd.f32 %v130, %v191
    %v202 = vadd.f32 %v131, %v191
    %v203 = vadd.f32 %v132, %v191
    %v204 = vadd.f32 %v133, %v191
    %v205 = vadd.f32 %v134, %v191
    %v206 = vadd.f32 %v135, %v191
    %v207 = vadd.f32 %v136, %v191
    %v208 = vadd.f32 %v137, %v191
    %v209 = vadd.f32 %v138, %v191
    %v210 = vadd.f32 %v139, %v191
    %v211 = vadd.f32 %v140, %v191
    %v212 = vadd.f32 %v141, %v191
    %v213 = vadd.f32 %v142, %v191
    %v214 = vadd.f32 %v143, %v191
    %v215 = vadd.f32 %v144, %v191
    %v216 = vadd.f32 %v145, %v191
    %v217 = vadd.f32 %v146, %v191
    %v218 = vadd.f32 %v147, %v191
    %v219 = vadd.f32 %v148, %v191
    %v220 = vadd.f32 %v149, %v191
    %v221 = vadd.f32 %v150, %v191
    %v222 = vadd.f32 %v151, %v191
    %v223 = vadd.f32 %v152, %v191
    %v224 = vadd.f32 %v153, %v191
    %v225 = vadd.f32 %v154, %v191
    %v226 = vadd.f32 %v155, %v191
    %v227 = vadd.f32 %v156, %v191
    %v228 = vadd.f32 %v157, %v191
    %v229 = vadd.f32 %v158, %v191
    %v230 = vadd.f32 %v159, %v191
    %v231 = vadd.f32 %v160, %v191
    %v232 = vadd.f32 %v161, %v191
    %v233 = vadd.f32 %v162, %v191
    %v234 = vadd.f32 %v163, %v191
    %v235 = vadd.f32 %v164, %v191
    %v236 = vadd.f32 %v165, %v191
    %v237 = vadd.f32 %v166, %v191
    %v238 = vadd.f32 %v167, %v191
    %v239 = vadd.f32 %v168, %v191
    %v240 = vadd.f32 %v169, %v191
    %v241 = vadd.f32 %v170, %v191
    %v242 = vadd.f32 %v171, %v191
    %v243 = vadd.f32 %v172, %v191
    %v244 = vadd.f32 %v173, %v191
    %v245 = vadd.f32 %v174, %v191
    %v246 = vadd.f32 %v175, %v191
    %v247 = vadd.f32 %v176, %v191
    %v248 = vadd.f32 %v177, %v191
    %v249 = vadd.f32 %v178, %v191
    %v250 = vadd.f32 %v179, %v191
    %v251 = vadd.f32 %v180, %v191
    %v252 = vadd.f32 %v181, %v191
    %v253 = vadd.f32 %v182, %v191
    %v254 = vadd.f32 %v183, %v191
    %v255 = vadd.f32 %v184, %v191
    %v256 = vadd.f32 %v185, %v191
    %v257 = vmax.f32 %v193, 0.0
    %v258 = vmax.f32 %v194, 0.0
    %v259 = vmax.f32 %v195, 0.0
    %v260 = vmax.f32 %v196, 0.0
    %v261 = vmax.f32 %v197, 0.0
    %v262 = vmax.f32 %v198, 0.0
    %v263 = vmax.f32 %v199, 0.0
    %v264 = vmax.f32 %v200, 0.0
    %v265 = vmax.f32 %v201, 0.0
    %v266 = vmax.f32 %v202, 0.0
    %v267 = vmax.f32 %v203, 0.0
    %v268 = vmax.f32 %v204, 0.0
    %v269 = vmax.f32 %v205, 0.0
    %v270 = vmax.f32 %v206, 0.0
    %v271 = vmax.f32 %v207, 0.0
    %v272 = vmax.f32 %v208, 0.0
    %v273 = vmax.f32 %v209, 0.0
    %v274 = vmax.f32 %v210, 0.0
    %v275 = vmax.f32 %v211, 0.0
    %v276 = vmax.f32 %v212, 0.0
    %v277 = vmax.f32 %v213, 0.0
    %v278 = vmax.f32 %v214, 0.0
    %v279 = vmax.f32 %v215, 0.0
    %v280 = vmax.f32 %v216, 0.0
    %v281 = vmax.f32 %v217, 0.0
    %v282 = vmax.f32 %v218, 0.0
    %v283 = vmax.f32 %v219, 0.0
    %v284 = vmax.f32 %v220, 0.0
    %v285 = vmax.f32 %v221, 0.0
    %v286 = vmax.f32 %v222, 0.0
    %v287 = vmax.f32 %v223, 0.0
    %v288 = vmax.f32 %v224, 0.0
    %v289 = vmax.f32 %v225, 0.0
    %v290 = vmax.f32 %v226, 0.0
    %v291 = vmax.f32 %v227, 0.0
    %v292 = vmax.f32 %v228, 0.0
    %v293 = vmax.f32 %v229, 0.0
    %v294 = vmax.f32 %v230, 0.0
    %v295 = vmax.f32 %v231, 0.0
    %v296 = vmax.f32 %v232, 0.0
    %v297 = vmax.f32 %v233, 0.0
    %v298 = vmax.f32 %v234, 0.0
    %v299 = vmax.f32 %v235, 0.0
    %v300 = vmax.f32 %v236, 0.0
    %v301 = vmax.f32 %v237, 0.0
    %v302 = vmax.f32 %v238, 0.0
    %v303 = vmax.f32 %v239, 0.0
    %v304 = vmax.f32 %v240, 0.0
    %v305 = vmax.f32 %v241, 0.0
    %v306 = vmax.f32 %v242, 0.0
    %v307 = vmax.f32 %v243, 0.0
    %v308 = vmax.f32 %v244, 0.0
    %v309 = vmax.f32 %v245, 0.0
    %v310 = vmax.f32 %v246, 0.0
    %v311 = vmax.f32 %v247, 0.0
    %v312 = vmax.f32 %v248, 0.0
    %v313 = vmax.f32 %v249, 0.0
    %v314 = vmax.f32 %v250, 0.0
    %v315 = vmax.f32 %v251, 0.0
    %v316 = vmax.f32 %v252, 0.0
    %v317 = vmax.f32 %v253, 0.0
    %v318 = vmax.f32 %v254, 0.0
    %v319 = vmax.f32 %v255, 0.0
    %v320 = vmax.f32 %v256, 0.0
    %v321 = vpack.c.bf16 %v258, %v257
    %v322 = vpack.c.bf16 %v260, %v259
    %v323 = vpack.c.bf16 %v262, %v261
    %v324 = vpack.c.bf16 %v264, %v263
    %v325 = vpack.c.bf16 %v266, %v265
    %v326 = vpack.c.bf16 %v268, %v267
    %v327 = vpack.c.bf16 %v270, %v269
    %v328 = vpack.c.bf16 %v272, %v271
    %v329 = vpack.c.bf16 %v274, %v273
    %v330 = vpack.c.bf16 %v276, %v275
    %v331 = vpack.c.bf16 %v278, %v277
    %v332 = vpack.c.bf16 %v280, %v279
    %v333 = vpack.c.bf16 %v282, %v281
    %v334 = vpack.c.bf16 %v284, %v283
    %v335 = vpack.c.bf16 %v286, %v285
    %v336 = vpack.c.bf16 %v288, %v287
    %v337 = vpack.c.bf16 %v290, %v289
    %v338 = vpack.c.bf16 %v292, %v291
    %v339 = vpack.c.bf16 %v294, %v293
    %v340 = vpack.c.bf16 %v296, %v295
    %v341 = vpack.c.bf16 %v298, %v297
    %v342 = vpack.c.bf16 %v300, %v299
    %v343 = vpack.c.bf16 %v302, %v301
    %v344 = vpack.c.bf16 %v304, %v303
    %v345 = vpack.c.bf16 %v306, %v305
    %v346 = vpack.c.bf16 %v308, %v307
    %v347 = vpack.c.bf16 %v310, %v309
    %v348 = vpack.c.bf16 %v312, %v311
    %v349 = vpack.c.bf16 %v314, %v313
    %v350 = vpack.c.bf16 %v316, %v315
    %v351 = vpack.c.bf16 %v318, %v317
    %v352 = vpack.c.bf16 %v320, %v319
    %v353 = vld [vmem:[#allocation5] sm:$0xff]
    %v354 = vld [vmem:[#allocation5 + $0x8] sm:$0xff]
    %v355 = vld [vmem:[#allocation5 + $0x10] sm:$0xff]
    %v356 = vld [vmem:[#allocation5 + $0x18] sm:$0xff]
    %v357 = vld [vmem:[#allocation5 + $0x20] sm:$0xff]
    %v358 = vld [vmem:[#allocation5 + $0x28] sm:$0xff]
    %v359 = vld [vmem:[#allocation5 + $0x30] sm:$0xff]
    %v360 = vld [vmem:[#allocation5 + $0x38] sm:$0xff]
    %v361 = vld [vmem:[#allocation5 + $0x40] sm:$0xff]
    %v362 = vld [vmem:[#allocation5 + $0x48] sm:$0xff]
    %v363 = vld [vmem:[#allocation5 + $0x50] sm:$0xff]
    %v364 = vld [vmem:[#allocation5 + $0x58] sm:$0xff]
    %v365 = vld [vmem:[#allocation5 + $0x60] sm:$0xff]
    %v366 = vld [vmem:[#allocation5 + $0x68] sm:$0xff]
    %v367 = vld [vmem:[#allocation5 + $0x70] sm:$0xff]
    %v368 = vld [vmem:[#allocation5 + $0x78] sm:$0xff]
    %v385 = vunpack.c.l.b16 %v353
    %v386 = vunpack.c.h.b16 %v353
    %v387 = vunpack.c.l.b16 %v354
    %v388 = vunpack.c.h.b16 %v354
    %v389 = vunpack.c.l.b16 %v355
    %v390 = vunpack.c.h.b16 %v355
    %v391 = vunpack.c.l.b16 %v356
    %v392 = vunpack.c.h.b16 %v356
    %v393 = vunpack.c.l.b16 %v357
    %v394 = vunpack.c.h.b16 %v357
    %v395 = vunpack.c.l.b16 %v358
    %v396 = vunpack.c.h.b16 %v358
    %v397 = vunpack.c.l.b16 %v359
    %v398 = vunpack.c.h.b16 %v359
    %v399 = vunpack.c.l.b16 %v360
    %v400 = vunpack.c.h.b16 %v360
    %v401 = vunpack.c.l.b16 %v361
    %v402 = vunpack.c.h.b16 %v361
    %v403 = vunpack.c.l.b16 %v362
    %v404 = vunpack.c.h.b16 %v362
    %v405 = vunpack.c.l.b16 %v363
    %v406 = vunpack.c.h.b16 %v363
    %v407 = vunpack.c.l.b16 %v364
    %v408 = vunpack.c.h.b16 %v364
    %v409 = vunpack.c.l.b16 %v365
    %v410 = vunpack.c.h.b16 %v365
    %v411 = vunpack.c.l.b16 %v366
    %v412 = vunpack.c.h.b16 %v366
    %v413 = vunpack.c.l.b16 %v367
    %v414 = vunpack.c.h.b16 %v367
    %v415 = vunpack.c.l.b16 %v368
    %v416 = vunpack.c.h.b16 %v368
    %v417 = vpack.c.b16 %v387, %v385
    %v418 = vpack.c.b16 %v388, %v386
    %v419 = vpack.c.b16 %v391, %v389
    %v420 = vpack.c.b16 %v392, %v390
    %v421 = vpack.c.b16 %v395, %v393
    %v422 = vpack.c.b16 %v396, %v394
    %v423 = vpack.c.b16 %v399, %v397
    %v424 = vpack.c.b16 %v400, %v398
    %v425 = vpack.c.b16 %v403, %v401
    %v426 = vpack.c.b16 %v404, %v402
    %v427 = vpack.c.b16 %v407, %v405
    %v428 = vpack.c.b16 %v408, %v406
    %v429 = vpack.c.b16 %v411, %v409
    %v430 = vpack.c.b16 %v412, %v410
    %v431 = vpack.c.b16 %v415, %v413
    %v432 = vpack.c.b16 %v416, %v414
    %449 = vmatprep.subr.bf16.mxu0 %v432
    %450 = vmatpush1.bf16.msra.mxu0 %v431
    %451 = vmatprep.subr.bf16.mxu0 %v430
    %452 = vmatpush1.bf16.msra.mxu0 %v429
    %453 = vmatprep.subr.bf16.mxu0 %v428
    %454 = vmatpush1.bf16.msra.mxu0 %v427
    %455 = vmatprep.subr.bf16.mxu0 %v426
    %456 = vmatpush1.bf16.msra.mxu0 %v425
    %457 = vmatprep.subr.bf16.mxu0 %v424
    %458 = vmatpush1.bf16.msra.mxu0 %v423
    %459 = vmatprep.subr.bf16.mxu0 %v422
    %460 = vmatpush1.bf16.msra.mxu0 %v421
    %461 = vmatprep.subr.bf16.mxu0 %v420
    %462 = vmatpush1.bf16.msra.mxu0 %v419
    %463 = vmatprep.subr.bf16.mxu0 %v418
    %464 = vmatpush1.bf16.msra.mxu0 %v417
    %465 = vmatprep.subr.bf16.mxu0 0
    %466 = vmatpush2.bf16.msra.mxu0 0
    %467 = vmatprep.subr.bf16.mxu0 0
    %468 = vmatpush2.bf16.msra.mxu0 0
    %469 = vmatprep.subr.bf16.mxu0 0
    %470 = vmatpush2.bf16.msra.mxu0 0
    %471 = vmatprep.subr.bf16.mxu0 0
    %472 = vmatpush2.bf16.msra.mxu0 0
    %473 = vmatprep.subr.bf16.mxu0 0
    %474 = vmatpush2.bf16.msra.mxu0 0
    %475 = vmatprep.subr.bf16.mxu0 0
    %476 = vmatpush2.bf16.msra.mxu0 0
    %477 = vmatprep.subr.bf16.mxu0 0
    %478 = vmatpush2.bf16.msra.mxu0 0
    %479 = vmatprep.subr.bf16.mxu0 0
    %480 = vmatpush2.bf16.msra.mxu0 0
    %481 = vmatprep.mubr.bf16.mxu0 0
    %482 = vmatmul.mubr.bf16.gmra.mxu0 %v321
    %v483 = vpop.f32.mrf.mxu0
    %v484 = vadd.f32 0.0, %v483
    %v485 = vpop.f32.mrf.mxu0
    %v486 = vadd.f32 0.0, %v485
    %v487 = vpop.f32.mrf.mxu0
    %v488 = vadd.f32 0.0, %v487
    %v489 = vpop.f32.mrf.mxu0
    %v490 = vadd.f32 0.0, %v489
    %491 = vmatprep.mubr.bf16.mxu0 0
    %492 = vmatmul.mubr.bf16.gmra.mxu0 %v322
    %v493 = vpop.f32.mrf.mxu0
    %v494 = vadd.f32 0.0, %v493
    %v495 = vpop.f32.mrf.mxu0
    %v496 = vadd.f32 0.0, %v495
    %v497 = vpop.f32.mrf.mxu0
    %v498 = vadd.f32 0.0, %v497
    %v499 = vpop.f32.mrf.mxu0
    %v500 = vadd.f32 0.0, %v499
    %501 = vmatprep.mubr.bf16.mxu0 0
    %502 = vmatmul.mubr.bf16.gmra.mxu0 %v323
    %v503 = vpop.f32.mrf.mxu0
    %v504 = vadd.f32 0.0, %v503
    %v505 = vpop.f32.mrf.mxu0
    %v506 = vadd.f32 0.0, %v505
    %v507 = vpop.f32.mrf.mxu0
    %v508 = vadd.f32 0.0, %v507
    %v509 = vpop.f32.mrf.mxu0
    %v510 = vadd.f32 0.0, %v509
    %511 = vmatprep.mubr.bf16.mxu0 0
    %512 = vmatmul.mubr.bf16.gmra.mxu0 %v324
    %v513 = vpop.f32.mrf.mxu0
    %v514 = vadd.f32 0.0, %v513
    %v515 = vpop.f32.mrf.mxu0
    %v516 = vadd.f32 0.0, %v515
    %v517 = vpop.f32.mrf.mxu0
    %v518 = vadd.f32 0.0, %v517
    %v519 = vpop.f32.mrf.mxu0
    %v520 = vadd.f32 0.0, %v519
    %521 = vmatprep.mubr.bf16.mxu0 0
    %522 = vmatmul.mubr.bf16.gmra.mxu0 %v325
    %v523 = vpop.f32.mrf.mxu0
    %v524 = vadd.f32 0.0, %v523
    %v525 = vpop.f32.mrf.mxu0
    %v526 = vadd.f32 0.0, %v525
    %v527 = vpop.f32.mrf.mxu0
    %v528 = vadd.f32 0.0, %v527
    %v529 = vpop.f32.mrf.mxu0
    %v530 = vadd.f32 0.0, %v529
    %531 = vmatprep.mubr.bf16.mxu0 0
    %532 = vmatmul.mubr.bf16.gmra.mxu0 %v326
    %v533 = vpop.f32.mrf.mxu0
    %v534 = vadd.f32 0.0, %v533
    %v535 = vpop.f32.mrf.mxu0
    %v536 = vadd.f32 0.0, %v535
    %v537 = vpop.f32.mrf.mxu0
    %v538 = vadd.f32 0.0, %v537
    %v539 = vpop.f32.mrf.mxu0
    %v540 = vadd.f32 0.0, %v539
    %541 = vmatprep.mubr.bf16.mxu0 0
    %542 = vmatmul.mubr.bf16.gmra.mxu0 %v327
    %v543 = vpop.f32.mrf.mxu0
    %v544 = vadd.f32 0.0, %v543
    %v545 = vpop.f32.mrf.mxu0
    %v546 = vadd.f32 0.0, %v545
    %v547 = vpop.f32.mrf.mxu0
    %v548 = vadd.f32 0.0, %v547
    %v549 = vpop.f32.mrf.mxu0
    %v550 = vadd.f32 0.0, %v549
    %551 = vmatprep.mubr.bf16.mxu0 0
    %552 = vmatmul.mubr.bf16.gmra.mxu0 %v328
    %v553 = vpop.f32.mrf.mxu0
    %v554 = vadd.f32 0.0, %v553
    %v555 = vpop.f32.mrf.mxu0
    %v556 = vadd.f32 0.0, %v555
    %v557 = vpop.f32.mrf.mxu0
    %v558 = vadd.f32 0.0, %v557
    %v559 = vpop.f32.mrf.mxu0
    %v560 = vadd.f32 0.0, %v559
    %561 = vmatprep.mubr.bf16.mxu0 0
    %562 = vmatmul.mubr.bf16.gmra.mxu0 %v329
    %v563 = vpop.f32.mrf.mxu0
    %v564 = vadd.f32 0.0, %v563
    %v565 = vpop.f32.mrf.mxu0
    %v566 = vadd.f32 0.0, %v565
    %v567 = vpop.f32.mrf.mxu0
    %v568 = vadd.f32 0.0, %v567
    %v569 = vpop.f32.mrf.mxu0
    %v570 = vadd.f32 0.0, %v569
    %571 = vmatprep.mubr.bf16.mxu0 0
    %572 = vmatmul.mubr.bf16.gmra.mxu0 %v330
    %v573 = vpop.f32.mrf.mxu0
    %v574 = vadd.f32 0.0, %v573
    %v575 = vpop.f32.mrf.mxu0
    %v576 = vadd.f32 0.0, %v575
    %v577 = vpop.f32.mrf.mxu0
    %v578 = vadd.f32 0.0, %v577
    %v579 = vpop.f32.mrf.mxu0
    %v580 = vadd.f32 0.0, %v579
    %581 = vmatprep.mubr.bf16.mxu0 0
    %582 = vmatmul.mubr.bf16.gmra.mxu0 %v331
    %v583 = vpop.f32.mrf.mxu0
    %v584 = vadd.f32 0.0, %v583
    %v585 = vpop.f32.mrf.mxu0
    %v586 = vadd.f32 0.0, %v585
    %v587 = vpop.f32.mrf.mxu0
    %v588 = vadd.f32 0.0, %v587
    %v589 = vpop.f32.mrf.mxu0
    %v590 = vadd.f32 0.0, %v589
    %591 = vmatprep.mubr.bf16.mxu0 0
    %592 = vmatmul.mubr.bf16.gmra.mxu0 %v332
    %v593 = vpop.f32.mrf.mxu0
    %v594 = vadd.f32 0.0, %v593
    %v595 = vpop.f32.mrf.mxu0
    %v596 = vadd.f32 0.0, %v595
    %v597 = vpop.f32.mrf.mxu0
    %v598 = vadd.f32 0.0, %v597
    %v599 = vpop.f32.mrf.mxu0
    %v600 = vadd.f32 0.0, %v599
    %601 = vmatprep.mubr.bf16.mxu0 0
    %602 = vmatmul.mubr.bf16.gmra.mxu0 %v333
    %v603 = vpop.f32.mrf.mxu0
    %v604 = vadd.f32 0.0, %v603
    %v605 = vpop.f32.mrf.mxu0
    %v606 = vadd.f32 0.0, %v605
    %v607 = vpop.f32.mrf.mxu0
    %v608 = vadd.f32 0.0, %v607
    %v609 = vpop.f32.mrf.mxu0
    %v610 = vadd.f32 0.0, %v609
    %611 = vmatprep.mubr.bf16.mxu0 0
    %612 = vmatmul.mubr.bf16.gmra.mxu0 %v334
    %v613 = vpop.f32.mrf.mxu0
    %v614 = vadd.f32 0.0, %v613
    %v615 = vpop.f32.mrf.mxu0
    %v616 = vadd.f32 0.0, %v615
    %v617 = vpop.f32.mrf.mxu0
    %v618 = vadd.f32 0.0, %v617
    %v619 = vpop.f32.mrf.mxu0
    %v620 = vadd.f32 0.0, %v619
    %621 = vmatprep.mubr.bf16.mxu0 0
    %622 = vmatmul.mubr.bf16.gmra.mxu0 %v335
    %v623 = vpop.f32.mrf.mxu0
    %v624 = vadd.f32 0.0, %v623
    %v625 = vpop.f32.mrf.mxu0
    %v626 = vadd.f32 0.0, %v625
    %v627 = vpop.f32.mrf.mxu0
    %v628 = vadd.f32 0.0, %v627
    %v629 = vpop.f32.mrf.mxu0
    %v630 = vadd.f32 0.0, %v629
    %631 = vmatprep.mubr.bf16.mxu0 0
    %632 = vmatmul.mubr.bf16.gmra.mxu0 %v336
    %v633 = vpop.f32.mrf.mxu0
    %v634 = vadd.f32 0.0, %v633
    %v635 = vpop.f32.mrf.mxu0
    %v636 = vadd.f32 0.0, %v635
    %v637 = vpop.f32.mrf.mxu0
    %v638 = vadd.f32 0.0, %v637
    %v639 = vpop.f32.mrf.mxu0
    %v640 = vadd.f32 0.0, %v639
    %641 = vmatprep.mubr.bf16.mxu0 0
    %642 = vmatmul.mubr.bf16.gmra.mxu0 %v337
    %v643 = vpop.f32.mrf.mxu0
    %v644 = vadd.f32 0.0, %v643
    %v645 = vpop.f32.mrf.mxu0
    %v646 = vadd.f32 0.0, %v645
    %v647 = vpop.f32.mrf.mxu0
    %v648 = vadd.f32 0.0, %v647
    %v649 = vpop.f32.mrf.mxu0
    %v650 = vadd.f32 0.0, %v649
    %651 = vmatprep.mubr.bf16.mxu0 0
    %652 = vmatmul.mubr.bf16.gmra.mxu0 %v338
    %v653 = vpop.f32.mrf.mxu0
    %v654 = vadd.f32 0.0, %v653
    %v655 = vpop.f32.mrf.mxu0
    %v656 = vadd.f32 0.0, %v655
    %v657 = vpop.f32.mrf.mxu0
    %v658 = vadd.f32 0.0, %v657
    %v659 = vpop.f32.mrf.mxu0
    %v660 = vadd.f32 0.0, %v659
    %661 = vmatprep.mubr.bf16.mxu0 0
    %662 = vmatmul.mubr.bf16.gmra.mxu0 %v339
    %v663 = vpop.f32.mrf.mxu0
    %v664 = vadd.f32 0.0, %v663
    %v665 = vpop.f32.mrf.mxu0
    %v666 = vadd.f32 0.0, %v665
    %v667 = vpop.f32.mrf.mxu0
    %v668 = vadd.f32 0.0, %v667
    %v669 = vpop.f32.mrf.mxu0
    %v670 = vadd.f32 0.0, %v669
    %671 = vmatprep.mubr.bf16.mxu0 0
    %672 = vmatmul.mubr.bf16.gmra.mxu0 %v340
    %v673 = vpop.f32.mrf.mxu0
    %v674 = vadd.f32 0.0, %v673
    %v675 = vpop.f32.mrf.mxu0
    %v676 = vadd.f32 0.0, %v675
    %v677 = vpop.f32.mrf.mxu0
    %v678 = vadd.f32 0.0, %v677
    %v679 = vpop.f32.mrf.mxu0
    %v680 = vadd.f32 0.0, %v679
    %681 = vmatprep.mubr.bf16.mxu0 0
    %682 = vmatmul.mubr.bf16.gmra.mxu0 %v341
    %v683 = vpop.f32.mrf.mxu0
    %v684 = vadd.f32 0.0, %v683
    %v685 = vpop.f32.mrf.mxu0
    %v686 = vadd.f32 0.0, %v685
    %v687 = vpop.f32.mrf.mxu0
    %v688 = vadd.f32 0.0, %v687
    %v689 = vpop.f32.mrf.mxu0
    %v690 = vadd.f32 0.0, %v689
    %691 = vmatprep.mubr.bf16.mxu0 0
    %692 = vmatmul.mubr.bf16.gmra.mxu0 %v342
    %v693 = vpop.f32.mrf.mxu0
    %v694 = vadd.f32 0.0, %v693
    %v695 = vpop.f32.mrf.mxu0
    %v696 = vadd.f32 0.0, %v695
    %v697 = vpop.f32.mrf.mxu0
    %v698 = vadd.f32 0.0, %v697
    %v699 = vpop.f32.mrf.mxu0
    %v700 = vadd.f32 0.0, %v699
    %701 = vmatprep.mubr.bf16.mxu0 0
    %702 = vmatmul.mubr.bf16.gmra.mxu0 %v343
    %v703 = vpop.f32.mrf.mxu0
    %v704 = vadd.f32 0.0, %v703
    %v705 = vpop.f32.mrf.mxu0
    %v706 = vadd.f32 0.0, %v705
    %v707 = vpop.f32.mrf.mxu0
    %v708 = vadd.f32 0.0, %v707
    %v709 = vpop.f32.mrf.mxu0
    %v710 = vadd.f32 0.0, %v709
    %711 = vmatprep.mubr.bf16.mxu0 0
    %712 = vmatmul.mubr.bf16.gmra.mxu0 %v344
    %v713 = vpop.f32.mrf.mxu0
    %v714 = vadd.f32 0.0, %v713
    %v715 = vpop.f32.mrf.mxu0
    %v716 = vadd.f32 0.0, %v715
    %v717 = vpop.f32.mrf.mxu0
    %v718 = vadd.f32 0.0, %v717
    %v719 = vpop.f32.mrf.mxu0
    %v720 = vadd.f32 0.0, %v719
    %721 = vmatprep.mubr.bf16.mxu0 0
    %722 = vmatmul.mubr.bf16.gmra.mxu0 %v345
    %v723 = vpop.f32.mrf.mxu0
    %v724 = vadd.f32 0.0, %v723
    %v725 = vpop.f32.mrf.mxu0
    %v726 = vadd.f32 0.0, %v725
    %v727 = vpop.f32.mrf.mxu0
    %v728 = vadd.f32 0.0, %v727
    %v729 = vpop.f32.mrf.mxu0
    %v730 = vadd.f32 0.0, %v729
    %731 = vmatprep.mubr.bf16.mxu0 0
    %732 = vmatmul.mubr.bf16.gmra.mxu0 %v346
    %v733 = vpop.f32.mrf.mxu0
    %v734 = vadd.f32 0.0, %v733
    %v735 = vpop.f32.mrf.mxu0
    %v736 = vadd.f32 0.0, %v735
    %v737 = vpop.f32.mrf.mxu0
    %v738 = vadd.f32 0.0, %v737
    %v739 = vpop.f32.mrf.mxu0
    %v740 = vadd.f32 0.0, %v739
    %741 = vmatprep.mubr.bf16.mxu0 0
    %742 = vmatmul.mubr.bf16.gmra.mxu0 %v347
    %v743 = vpop.f32.mrf.mxu0
    %v744 = vadd.f32 0.0, %v743
    %v745 = vpop.f32.mrf.mxu0
    %v746 = vadd.f32 0.0, %v745
    %v747 = vpop.f32.mrf.mxu0
    %v748 = vadd.f32 0.0, %v747
    %v749 = vpop.f32.mrf.mxu0
    %v750 = vadd.f32 0.0, %v749
    %751 = vmatprep.mubr.bf16.mxu0 0
    %752 = vmatmul.mubr.bf16.gmra.mxu0 %v348
    %v753 = vpop.f32.mrf.mxu0
    %v754 = vadd.f32 0.0, %v753
    %v755 = vpop.f32.mrf.mxu0
    %v756 = vadd.f32 0.0, %v755
    %v757 = vpop.f32.mrf.mxu0
    %v758 = vadd.f32 0.0, %v757
    %v759 = vpop.f32.mrf.mxu0
    %v760 = vadd.f32 0.0, %v759
    %761 = vmatprep.mubr.bf16.mxu0 0
    %762 = vmatmul.mubr.bf16.gmra.mxu0 %v349
    %v763 = vpop.f32.mrf.mxu0
    %v764 = vadd.f32 0.0, %v763
    %v765 = vpop.f32.mrf.mxu0
    %v766 = vadd.f32 0.0, %v765
    %v767 = vpop.f32.mrf.mxu0
    %v768 = vadd.f32 0.0, %v767
    %v769 = vpop.f32.mrf.mxu0
    %v770 = vadd.f32 0.0, %v769
    %771 = vmatprep.mubr.bf16.mxu0 0
    %772 = vmatmul.mubr.bf16.gmra.mxu0 %v350
    %v773 = vpop.f32.mrf.mxu0
    %v774 = vadd.f32 0.0, %v773
    %v775 = vpop.f32.mrf.mxu0
    %v776 = vadd.f32 0.0, %v775
    %v777 = vpop.f32.mrf.mxu0
    %v778 = vadd.f32 0.0, %v777
    %v779 = vpop.f32.mrf.mxu0
    %v780 = vadd.f32 0.0, %v779
    %781 = vmatprep.mubr.bf16.mxu0 0
    %782 = vmatmul.mubr.bf16.gmra.mxu0 %v351
    %v783 = vpop.f32.mrf.mxu0
    %v784 = vadd.f32 0.0, %v783
    %v785 = vpop.f32.mrf.mxu0
    %v786 = vadd.f32 0.0, %v785
    %v787 = vpop.f32.mrf.mxu0
    %v788 = vadd.f32 0.0, %v787
    %v789 = vpop.f32.mrf.mxu0
    %v790 = vadd.f32 0.0, %v789
    %791 = vmatprep.mubr.bf16.mxu0 0
    %792 = vmatmul.mubr.bf16.gmra.mxu0 %v352
    %v793 = vpop.f32.mrf.mxu0
    %v794 = vadd.f32 0.0, %v793
    %v795 = vpop.f32.mrf.mxu0
    %v796 = vadd.f32 0.0, %v795
    %v797 = vpop.f32.mrf.mxu0
    %v798 = vadd.f32 0.0, %v797
    %v799 = vpop.f32.mrf.mxu0
    %v800 = vadd.f32 0.0, %v799
    %801 = vdwg.mxu0
    %v802 = vpack.c.bf16 %v488, %v484
    %v803 = vpack.c.bf16 %v498, %v494
    %v804 = vpack.c.bf16 %v508, %v504
    %v805 = vpack.c.bf16 %v518, %v514
    %v806 = vpack.c.bf16 %v528, %v524
    %v807 = vpack.c.bf16 %v538, %v534
    %v808 = vpack.c.bf16 %v548, %v544
    %v809 = vpack.c.bf16 %v558, %v554
    %v810 = vpack.c.bf16 %v568, %v564
    %v811 = vpack.c.bf16 %v578, %v574
    %v812 = vpack.c.bf16 %v588, %v584
    %v813 = vpack.c.bf16 %v598, %v594
    %v814 = vpack.c.bf16 %v608, %v604
    %v815 = vpack.c.bf16 %v618, %v614
    %v816 = vpack.c.bf16 %v628, %v624
    %v817 = vpack.c.bf16 %v638, %v634
    %v818 = vpack.c.bf16 %v648, %v644
    %v819 = vpack.c.bf16 %v658, %v654
    %v820 = vpack.c.bf16 %v668, %v664
    %v821 = vpack.c.bf16 %v678, %v674
    %v822 = vpack.c.bf16 %v688, %v684
    %v823 = vpack.c.bf16 %v698, %v694
    %v824 = vpack.c.bf16 %v708, %v704
    %v825 = vpack.c.bf16 %v718, %v714
    %v826 = vpack.c.bf16 %v728, %v724
    %v827 = vpack.c.bf16 %v738, %v734
    %v828 = vpack.c.bf16 %v748, %v744
    %v829 = vpack.c.bf16 %v758, %v754
    %v830 = vpack.c.bf16 %v768, %v764
    %v831 = vpack.c.bf16 %v778, %v774
    %v832 = vpack.c.bf16 %v788, %v784
    %v833 = vpack.c.bf16 %v798, %v794
    %v866 = vunpack.c.l.b16 %v802
    %v867 = vunpack.c.h.b16 %v802
    %v868 = vunpack.c.l.b16 %v803
    %v869 = vunpack.c.h.b16 %v803
    %v870 = vunpack.c.l.b16 %v804
    %v871 = vunpack.c.h.b16 %v804
    %v872 = vunpack.c.l.b16 %v805
    %v873 = vunpack.c.h.b16 %v805
    %v874 = vunpack.c.l.b16 %v806
    %v875 = vunpack.c.h.b16 %v806
    %v876 = vunpack.c.l.b16 %v807
    %v877 = vunpack.c.h.b16 %v807
    %v878 = vunpack.c.l.b16 %v808
    %v879 = vunpack.c.h.b16 %v808
    %v880 = vunpack.c.l.b16 %v809
    %v881 = vunpack.c.h.b16 %v809
    %v882 = vunpack.c.l.b16 %v810
    %v883 = vunpack.c.h.b16 %v810
    %v884 = vunpack.c.l.b16 %v811
    %v885 = vunpack.c.h.b16 %v811
    %v886 = vunpack.c.l.b16 %v812
    %v887 = vunpack.c.h.b16 %v812
    %v888 = vunpack.c.l.b16 %v813
    %v889 = vunpack.c.h.b16 %v813
    %v890 = vunpack.c.l.b16 %v814
    %v891 = vunpack.c.h.b16 %v814
    %v892 = vunpack.c.l.b16 %v815
    %v893 = vunpack.c.h.b16 %v815
    %v894 = vunpack.c.l.b16 %v816
    %v895 = vunpack.c.h.b16 %v816
    %v896 = vunpack.c.l.b16 %v817
    %v897 = vunpack.c.h.b16 %v817
    %v898 = vunpack.c.l.b16 %v818
    %v899 = vunpack.c.h.b16 %v818
    %v900 = vunpack.c.l.b16 %v819
    %v901 = vunpack.c.h.b16 %v819
    %v902 = vunpack.c.l.b16 %v820
    %v903 = vunpack.c.h.b16 %v820
    %v904 = vunpack.c.l.b16 %v821
    %v905 = vunpack.c.h.b16 %v821
    %v906 = vunpack.c.l.b16 %v822
    %v907 = vunpack.c.h.b16 %v822
    %v908 = vunpack.c.l.b16 %v823
    %v909 = vunpack.c.h.b16 %v823
    %v910 = vunpack.c.l.b16 %v824
    %v911 = vunpack.c.h.b16 %v824
    %v912 = vunpack.c.l.b16 %v825
    %v913 = vunpack.c.h.b16 %v825
    %v914 = vunpack.c.l.b16 %v826
    %v915 = vunpack.c.h.b16 %v826
    %v916 = vunpack.c.l.b16 %v827
    %v917 = vunpack.c.h.b16 %v827
    %v918 = vunpack.c.l.b16 %v828
    %v919 = vunpack.c.h.b16 %v828
    %v920 = vunpack.c.l.b16 %v829
    %v921 = vunpack.c.h.b16 %v829
    %v922 = vunpack.c.l.b16 %v830
    %v923 = vunpack.c.h.b16 %v830
    %v924 = vunpack.c.l.b16 %v831
    %v925 = vunpack.c.h.b16 %v831
    %v926 = vunpack.c.l.b16 %v832
    %v927 = vunpack.c.h.b16 %v832
    %v928 = vunpack.c.l.b16 %v833
    %v929 = vunpack.c.h.b16 %v833
    %v930 = vpack.c.b16 %v866, %v866
    %v931 = vpack.c.b16 %v867, %v867
    %v932 = vpack.c.b16 %v868, %v868
    %v933 = vpack.c.b16 %v869, %v869
    %v934 = vpack.c.b16 %v870, %v870
    %v935 = vpack.c.b16 %v871, %v871
    %v936 = vpack.c.b16 %v872, %v872
    %v937 = vpack.c.b16 %v873, %v873
    %v938 = vpack.c.b16 %v874, %v874
    %v939 = vpack.c.b16 %v875, %v875
    %v940 = vpack.c.b16 %v876, %v876
    %v941 = vpack.c.b16 %v877, %v877
    %v942 = vpack.c.b16 %v878, %v878
    %v943 = vpack.c.b16 %v879, %v879
    %v944 = vpack.c.b16 %v880, %v880
    %v945 = vpack.c.b16 %v881, %v881
    %v946 = vpack.c.b16 %v882, %v882
    %v947 = vpack.c.b16 %v883, %v883
    %v948 = vpack.c.b16 %v884, %v884
    %v949 = vpack.c.b16 %v885, %v885
    %v950 = vpack.c.b16 %v886, %v886
    %v951 = vpack.c.b16 %v887, %v887
    %v952 = vpack.c.b16 %v888, %v888
    %v953 = vpack.c.b16 %v889, %v889
    %v954 = vpack.c.b16 %v890, %v890
    %v955 = vpack.c.b16 %v891, %v891
    %v956 = vpack.c.b16 %v892, %v892
    %v957 = vpack.c.b16 %v893, %v893
    %v958 = vpack.c.b16 %v894, %v894
    %v959 = vpack.c.b16 %v895, %v895
    %v960 = vpack.c.b16 %v896, %v896
    %v961 = vpack.c.b16 %v897, %v897
    %v962 = vpack.c.b16 %v898, %v898
    %v963 = vpack.c.b16 %v899, %v899
    %v964 = vpack.c.b16 %v900, %v900
    %v965 = vpack.c.b16 %v901, %v901
    %v966 = vpack.c.b16 %v902, %v902
    %v967 = vpack.c.b16 %v903, %v903
    %v968 = vpack.c.b16 %v904, %v904
    %v969 = vpack.c.b16 %v905, %v905
    %v970 = vpack.c.b16 %v906, %v906
    %v971 = vpack.c.b16 %v907, %v907
    %v972 = vpack.c.b16 %v908, %v908
    %v973 = vpack.c.b16 %v909, %v909
    %v974 = vpack.c.b16 %v910, %v910
    %v975 = vpack.c.b16 %v911, %v911
    %v976 = vpack.c.b16 %v912, %v912
    %v977 = vpack.c.b16 %v913, %v913
    %v978 = vpack.c.b16 %v914, %v914
    %v979 = vpack.c.b16 %v915, %v915
    %v980 = vpack.c.b16 %v916, %v916
    %v981 = vpack.c.b16 %v917, %v917
    %v982 = vpack.c.b16 %v918, %v918
    %v983 = vpack.c.b16 %v919, %v919
    %v984 = vpack.c.b16 %v920, %v920
    %v985 = vpack.c.b16 %v921, %v921
    %v986 = vpack.c.b16 %v922, %v922
    %v987 = vpack.c.b16 %v923, %v923
    %v988 = vpack.c.b16 %v924, %v924
    %v989 = vpack.c.b16 %v925, %v925
    %v990 = vpack.c.b16 %v926, %v926
    %v991 = vpack.c.b16 %v927, %v927
    %v992 = vpack.c.b16 %v928, %v928
    %v993 = vpack.c.b16 %v929, %v929
    %1058 = vst [vmem:[#allocation7] sm:$0xf] %v930
    %1059 = vst [vmem:[#allocation7 + $0x4] sm:$0xf] %v931
    %1060 = vst [vmem:[#allocation7 + $0x8] sm:$0xf] %v932
    %1061 = vst [vmem:[#allocation7 + $0xc] sm:$0xf] %v933
    %1062 = vst [vmem:[#allocation7 + $0x10] sm:$0xf] %v934
    %1063 = vst [vmem:[#allocation7 + $0x14] sm:$0xf] %v935
    %1064 = vst [vmem:[#allocation7 + $0x18] sm:$0xf] %v936
    %1065 = vst [vmem:[#allocation7 + $0x1c] sm:$0xf] %v937
    %1066 = vst [vmem:[#allocation7 + $0x20] sm:$0xf] %v938
    %1067 = vst [vmem:[#allocation7 + $0x24] sm:$0xf] %v939
    %1068 = vst [vmem:[#allocation7 + $0x28] sm:$0xf] %v940
    %1069 = vst [vmem:[#allocation7 + $0x2c] sm:$0xf] %v941
    %1070 = vst [vmem:[#allocation7 + $0x30] sm:$0xf] %v942
    %1071 = vst [vmem:[#allocation7 + $0x34] sm:$0xf] %v943
    %1072 = vst [vmem:[#allocation7 + $0x38] sm:$0xf] %v944
    %1073 = vst [vmem:[#allocation7 + $0x3c] sm:$0xf] %v945
    %1074 = vst [vmem:[#allocation7 + $0x40] sm:$0xf] %v946
    %1075 = vst [vmem:[#allocation7 + $0x44] sm:$0xf] %v947
    %1076 = vst [vmem:[#allocation7 + $0x48] sm:$0xf] %v948
    %1077 = vst [vmem:[#allocation7 + $0x4c] sm:$0xf] %v949
    %1078 = vst [vmem:[#allocation7 + $0x50] sm:$0xf] %v950
    %1079 = vst [vmem:[#allocation7 + $0x54] sm:$0xf] %v951
    %1080 = vst [vmem:[#allocation7 + $0x58] sm:$0xf] %v952
    %1081 = vst [vmem:[#allocation7 + $0x5c] sm:$0xf] %v953
    %1082 = vst [vmem:[#allocation7 + $0x60] sm:$0xf] %v954
    %1083 = vst [vmem:[#allocation7 + $0x64] sm:$0xf] %v955
    %1084 = vst [vmem:[#allocation7 + $0x68] sm:$0xf] %v956
    %1085 = vst [vmem:[#allocation7 + $0x6c] sm:$0xf] %v957
    %1086 = vst [vmem:[#allocation7 + $0x70] sm:$0xf] %v958
    %1087 = vst [vmem:[#allocation7 + $0x74] sm:$0xf] %v959
    %1088 = vst [vmem:[#allocation7 + $0x78] sm:$0xf] %v960
    %1089 = vst [vmem:[#allocation7 + $0x7c] sm:$0xf] %v961
    %1090 = vst [vmem:[#allocation7 + $0x80] sm:$0xf] %v962
    %1091 = vst [vmem:[#allocation7 + $0x84] sm:$0xf] %v963
    %1092 = vst [vmem:[#allocation7 + $0x88] sm:$0xf] %v964
    %1093 = vst [vmem:[#allocation7 + $0x8c] sm:$0xf] %v965
    %1094 = vst [vmem:[#allocation7 + $0x90] sm:$0xf] %v966
    %1095 = vst [vmem:[#allocation7 + $0x94] sm:$0xf] %v967
    %1096 = vst [vmem:[#allocation7 + $0x98] sm:$0xf] %v968
    %1097 = vst [vmem:[#allocation7 + $0x9c] sm:$0xf] %v969
    %1098 = vst [vmem:[#allocation7 + $0xa0] sm:$0xf] %v970
    %1099 = vst [vmem:[#allocation7 + $0xa4] sm:$0xf] %v971
    %1100 = vst [vmem:[#allocation7 + $0xa8] sm:$0xf] %v972
    %1101 = vst [vmem:[#allocation7 + $0xac] sm:$0xf] %v973
    %1102 = vst [vmem:[#allocation7 + $0xb0] sm:$0xf] %v974
    %1103 = vst [vmem:[#allocation7 + $0xb4] sm:$0xf] %v975
    %1104 = vst [vmem:[#allocation7 + $0xb8] sm:$0xf] %v976
    %1105 = vst [vmem:[#allocation7 + $0xbc] sm:$0xf] %v977
    %1106 = vst [vmem:[#allocation7 + $0xc0] sm:$0xf] %v978
    %1107 = vst [vmem:[#allocation7 + $0xc4] sm:$0xf] %v979
    %1108 = vst [vmem:[#allocation7 + $0xc8] sm:$0xf] %v980
    %1109 = vst [vmem:[#allocation7 + $0xcc] sm:$0xf] %v981
    %1110 = vst [vmem:[#allocation7 + $0xd0] sm:$0xf] %v982
    %1111 = vst [vmem:[#allocation7 + $0xd4] sm:$0xf] %v983
    %1112 = vst [vmem:[#allocation7 + $0xd8] sm:$0xf] %v984
    %1113 = vst [vmem:[#allocation7 + $0xdc] sm:$0xf] %v985
    %1114 = vst [vmem:[#allocation7 + $0xe0] sm:$0xf] %v986
    %1115 = vst [vmem:[#allocation7 + $0xe4] sm:$0xf] %v987
    %1116 = vst [vmem:[#allocation7 + $0xe8] sm:$0xf] %v988
    %1117 = vst [vmem:[#allocation7 + $0xec] sm:$0xf] %v989
    %1118 = vst [vmem:[#allocation7 + $0xf0] sm:$0xf] %v990
    %1119 = vst [vmem:[#allocation7 + $0xf4] sm:$0xf] %v991
    %1120 = vst [vmem:[#allocation7 + $0xf8] sm:$0xf] %v992
    %1121 = vst [vmem:[#allocation7 + $0xfc] sm:$0xf] %v993
    %1122 = vst [vmem:[#allocation8] sm:$0xff] %v486
    %1123 = vst [vmem:[#allocation8 + $0x8] sm:$0xff] %v490
    %1124 = vst [vmem:[#allocation8 + $0x10] sm:$0xff] %v496
    %1125 = vst [vmem:[#allocation8 + $0x18] sm:$0xff] %v500
    %1126 = vst [vmem:[#allocation8 + $0x20] sm:$0xff] %v506
    %1127 = vst [vmem:[#allocation8 + $0x28] sm:$0xff] %v510
    %1128 = vst [vmem:[#allocation8 + $0x30] sm:$0xff] %v516
    %1129 = vst [vmem:[#allocation8 + $0x38] sm:$0xff] %v520
    %1130 = vst [vmem:[#allocation8 + $0x40] sm:$0xff] %v526
    %1131 = vst [vmem:[#allocation8 + $0x48] sm:$0xff] %v530
    %1132 = vst [vmem:[#allocation8 + $0x50] sm:$0xff] %v536
    %1133 = vst [vmem:[#allocation8 + $0x58] sm:$0xff] %v540
    %1134 = vst [vmem:[#allocation8 + $0x60] sm:$0xff] %v546
    %1135 = vst [vmem:[#allocation8 + $0x68] sm:$0xff] %v550
    %1136 = vst [vmem:[#allocation8 + $0x70] sm:$0xff] %v556
    %1137 = vst [vmem:[#allocation8 + $0x78] sm:$0xff] %v560
    %1138 = vst [vmem:[#allocation8 + $0x80] sm:$0xff] %v566
    %1139 = vst [vmem:[#allocation8 + $0x88] sm:$0xff] %v570
    %1140 = vst [vmem:[#allocation8 + $0x90] sm:$0xff] %v576
    %1141 = vst [vmem:[#allocation8 + $0x98] sm:$0xff] %v580
    %1142 = vst [vmem:[#allocation8 + $0xa0] sm:$0xff] %v586
    %1143 = vst [vmem:[#allocation8 + $0xa8] sm:$0xff] %v590
    %1144 = vst [vmem:[#allocation8 + $0xb0] sm:$0xff] %v596
    %1145 = vst [vmem:[#allocation8 + $0xb8] sm:$0xff] %v600
    %1146 = vst [vmem:[#allocation8 + $0xc0] sm:$0xff] %v606
    %1147 = vst [vmem:[#allocation8 + $0xc8] sm:$0xff] %v610
    %1148 = vst [vmem:[#allocation8 + $0xd0] sm:$0xff] %v616
    %1149 = vst [vmem:[#allocation8 + $0xd8] sm:$0xff] %v620
    %1150 = vst [vmem:[#allocation8 + $0xe0] sm:$0xff] %v626
    %1151 = vst [vmem:[#allocation8 + $0xe8] sm:$0xff] %v630
    %1152 = vst [vmem:[#allocation8 + $0xf0] sm:$0xff] %v636
    %1153 = vst [vmem:[#allocation8 + $0xf8] sm:$0xff] %v640
    %1154 = vst [vmem:[#allocation8 + $0x100] sm:$0xff] %v646
    %1155 = vst [vmem:[#allocation8 + $0x108] sm:$0xff] %v650
    %1156 = vst [vmem:[#allocation8 + $0x110] sm:$0xff] %v656
    %1157 = vst [vmem:[#allocation8 + $0x118] sm:$0xff] %v660
    %1158 = vst [vmem:[#allocation8 + $0x120] sm:$0xff] %v666
    %1159 = vst [vmem:[#allocation8 + $0x128] sm:$0xff] %v670
    %1160 = vst [vmem:[#allocation8 + $0x130] sm:$0xff] %v676
    %1161 = vst [vmem:[#allocation8 + $0x138] sm:$0xff] %v680
    %1162 = vst [vmem:[#allocation8 + $0x140] sm:$0xff] %v686
    %1163 = vst [vmem:[#allocation8 + $0x148] sm:$0xff] %v690
    %1164 = vst [vmem:[#allocation8 + $0x150] sm:$0xff] %v696
    %1165 = vst [vmem:[#allocation8 + $0x158] sm:$0xff] %v700
    %1166 = vst [vmem:[#allocation8 + $0x160] sm:$0xff] %v706
    %1167 = vst [vmem:[#allocation8 + $0x168] sm:$0xff] %v710
    %1168 = vst [vmem:[#allocation8 + $0x170] sm:$0xff] %v716
    %1169 = vst [vmem:[#allocation8 + $0x178] sm:$0xff] %v720
    %1170 = vst [vmem:[#allocation8 + $0x180] sm:$0xff] %v726
    %1171 = vst [vmem:[#allocation8 + $0x188] sm:$0xff] %v730
    %1172 = vst [vmem:[#allocation8 + $0x190] sm:$0xff] %v736
    %1173 = vst [vmem:[#allocation8 + $0x198] sm:$0xff] %v740
    %1174 = vst [vmem:[#allocation8 + $0x1a0] sm:$0xff] %v746
    %1175 = vst [vmem:[#allocation8 + $0x1a8] sm:$0xff] %v750
    %1176 = vst [vmem:[#allocation8 + $0x1b0] sm:$0xff] %v756
    %1177 = vst [vmem:[#allocation8 + $0x1b8] sm:$0xff] %v760
    %1178 = vst [vmem:[#allocation8 + $0x1c0] sm:$0xff] %v766
    %1179 = vst [vmem:[#allocation8 + $0x1c8] sm:$0xff] %v770
    %1180 = vst [vmem:[#allocation8 + $0x1d0] sm:$0xff] %v776
    %1181 = vst [vmem:[#allocation8 + $0x1d8] sm:$0xff] %v780
    %1182 = vst [vmem:[#allocation8 + $0x1e0] sm:$0xff] %v786
    %1183 = vst [vmem:[#allocation8 + $0x1e8] sm:$0xff] %v790
    %1184 = vst [vmem:[#allocation8 + $0x1f0] sm:$0xff] %v796
    %1185 = vst [vmem:[#allocation8 + $0x1f8] sm:$0xff] %v800
    %v1186 = vadd.f32 %v484, %v488
    %v1187 = vadd.f32 %v1186, %v494
    %v1188 = vadd.f32 %v1187, %v498
    %v1189 = vadd.f32 %v1188, %v504
    %v1190 = vadd.f32 %v1189, %v508
    %v1191 = vadd.f32 %v1190, %v514
    %v1192 = vadd.f32 %v1191, %v518
    %v1193 = vadd.f32 %v1192, %v524
    %v1194 = vadd.f32 %v1193, %v528
    %v1195 = vadd.f32 %v1194, %v534
    %v1196 = vadd.f32 %v1195, %v538
    %v1197 = vadd.f32 %v1196, %v544
    %v1198 = vadd.f32 %v1197, %v548
    %v1199 = vadd.f32 %v1198, %v554
    %v1200 = vadd.f32 %v1199, %v558
    %v1201 = vadd.f32 %v1200, %v564
    %v1202 = vadd.f32 %v1201, %v568
    %v1203 = vadd.f32 %v1202, %v574
    %v1204 = vadd.f32 %v1203, %v578
    %v1205 = vadd.f32 %v1204, %v584
    %v1206 = vadd.f32 %v1205, %v588
    %v1207 = vadd.f32 %v1206, %v594
    %v1208 = vadd.f32 %v1207, %v598
    %v1209 = vadd.f32 %v1208, %v604
    %v1210 = vadd.f32 %v1209, %v608
    %v1211 = vadd.f32 %v1210, %v614
    %v1212 = vadd.f32 %v1211, %v618
    %v1213 = vadd.f32 %v1212, %v624
    %v1214 = vadd.f32 %v1213, %v628
    %v1215 = vadd.f32 %v1214, %v634
    %v1216 = vadd.f32 %v1215, %v638
    %v1217 = vadd.f32 %v1216, %v644
    %v1218 = vadd.f32 %v1217, %v648
    %v1219 = vadd.f32 %v1218, %v654
    %v1220 = vadd.f32 %v1219, %v658
    %v1221 = vadd.f32 %v1220, %v664
    %v1222 = vadd.f32 %v1221, %v668
    %v1223 = vadd.f32 %v1222, %v674
    %v1224 = vadd.f32 %v1223, %v678
    %v1225 = vadd.f32 %v1224, %v684
    %v1226 = vadd.f32 %v1225, %v688
    %v1227 = vadd.f32 %v1226, %v694
    %v1228 = vadd.f32 %v1227, %v698
    %v1229 = vadd.f32 %v1228, %v704
    %v1230 = vadd.f32 %v1229, %v708
    %v1231 = vadd.f32 %v1230, %v714
    %v1232 = vadd.f32 %v1231, %v718
    %v1233 = vadd.f32 %v1232, %v724
    %v1234 = vadd.f32 %v1233, %v728
    %v1235 = vadd.f32 %v1234, %v734
    %v1236 = vadd.f32 %v1235, %v738
    %v1237 = vadd.f32 %v1236, %v744
    %v1238 = vadd.f32 %v1237, %v748
    %v1239 = vadd.f32 %v1238, %v754
    %v1240 = vadd.f32 %v1239, %v758
    %v1241 = vadd.f32 %v1240, %v764
    %v1242 = vadd.f32 %v1241, %v768
    %v1243 = vadd.f32 %v1242, %v774
    %v1244 = vadd.f32 %v1243, %v778
    %v1245 = vadd.f32 %v1244, %v784
    %v1246 = vadd.f32 %v1245, %v788
    %v1247 = vadd.f32 %v1246, %v794
    %v1248 = vadd.f32 %v1247, %v798
    %v1249 = vrot.slane %v1248, 4
    %v1250 = vadd.f32 %v1248, %v1249
    %v1251 = vrot.slane %v1250, 2
    %v1252 = vadd.f32 %v1250, %v1251
    %v1253 = vrot.slane %v1252, 1
    %v1254 = vadd.f32 %v1252, %v1253
    %1255 = vst [vmem:[#allocation10] sm:$0x1] %v1254
    %v1256 = vmul.f32 %v484, %v484
    %v1257 = vmul.f32 %v488, %v488
    %v1258 = vmul.f32 %v494, %v494
    %v1259 = vmul.f32 %v498, %v498
    %v1260 = vmul.f32 %v504, %v504
    %v1261 = vmul.f32 %v508, %v508
    %v1262 = vmul.f32 %v514, %v514
    %v1263 = vmul.f32 %v518, %v518
    %v1264 = vmul.f32 %v524, %v524
    %v1265 = vmul.f32 %v528, %v528
    %v1266 = vmul.f32 %v534, %v534
    %v1267 = vmul.f32 %v538, %v538
    %v1268 = vmul.f32 %v544, %v544
    %v1269 = vmul.f32 %v548, %v548
    %v1270 = vmul.f32 %v554, %v554
    %v1271 = vmul.f32 %v558, %v558
    %v1272 = vmul.f32 %v564, %v564
    %v1273 = vmul.f32 %v568, %v568
    %v1274 = vmul.f32 %v574, %v574
    %v1275 = vmul.f32 %v578, %v578
    %v1276 = vmul.f32 %v584, %v584
    %v1277 = vmul.f32 %v588, %v588
    %v1278 = vmul.f32 %v594, %v594
    %v1279 = vmul.f32 %v598, %v598
    %v1280 = vmul.f32 %v604, %v604
    %v1281 = vmul.f32 %v608, %v608
    %v1282 = vmul.f32 %v614, %v614
    %v1283 = vmul.f32 %v618, %v618
    %v1284 = vmul.f32 %v624, %v624
    %v1285 = vmul.f32 %v628, %v628
    %v1286 = vmul.f32 %v634, %v634
    %v1287 = vmul.f32 %v638, %v638
    %v1288 = vmul.f32 %v644, %v644
    %v1289 = vmul.f32 %v648, %v648
    %v1290 = vmul.f32 %v654, %v654
    %v1291 = vmul.f32 %v658, %v658
    %v1292 = vmul.f32 %v664, %v664
    %v1293 = vmul.f32 %v668, %v668
    %v1294 = vmul.f32 %v674, %v674
    %v1295 = vmul.f32 %v678, %v678
    %v1296 = vmul.f32 %v684, %v684
    %v1297 = vmul.f32 %v688, %v688
    %v1298 = vmul.f32 %v694, %v694
    %v1299 = vmul.f32 %v698, %v698
    %v1300 = vmul.f32 %v704, %v704
    %v1301 = vmul.f32 %v708, %v708
    %v1302 = vmul.f32 %v714, %v714
    %v1303 = vmul.f32 %v718, %v718
    %v1304 = vmul.f32 %v724, %v724
    %v1305 = vmul.f32 %v728, %v728
    %v1306 = vmul.f32 %v734, %v734
    %v1307 = vmul.f32 %v738, %v738
    %v1308 = vmul.f32 %v744, %v744
    %v1309 = vmul.f32 %v748, %v748
    %v1310 = vmul.f32 %v754, %v754
    %v1311 = vmul.f32 %v758, %v758
    %v1312 = vmul.f32 %v764, %v764
    %v1313 = vmul.f32 %v768, %v768
    %v1314 = vmul.f32 %v774, %v774
    %v1315 = vmul.f32 %v778, %v778
    %v1316 = vmul.f32 %v784, %v784
    %v1317 = vmul.f32 %v788, %v788
    %v1318 = vmul.f32 %v794, %v794
    %v1319 = vmul.f32 %v798, %v798
    %v1320 = vadd.f32 %v1256, %v1257
    %v1321 = vadd.f32 %v1320, %v1258
    %v1322 = vadd.f32 %v1321, %v1259
    %v1323 = vadd.f32 %v1322, %v1260
    %v1324 = vadd.f32 %v1323, %v1261
    %v1325 = vadd.f32 %v1324, %v1262
    %v1326 = vadd.f32 %v1325, %v1263
    %v1327 = vadd.f32 %v1326, %v1264
    %v1328 = vadd.f32 %v1327, %v1265
    %v1329 = vadd.f32 %v1328, %v1266
    %v1330 = vadd.f32 %v1329, %v1267
    %v1331 = vadd.f32 %v1330, %v1268
    %v1332 = vadd.f32 %v1331, %v1269
    %v1333 = vadd.f32 %v1332, %v1270
    %v1334 = vadd.f32 %v1333, %v1271
    %v1335 = vadd.f32 %v1334, %v1272
    %v1336 = vadd.f32 %v1335, %v1273
    %v1337 = vadd.f32 %v1336, %v1274
    %v1338 = vadd.f32 %v1337, %v1275
    %v1339 = vadd.f32 %v1338, %v1276
    %v1340 = vadd.f32 %v1339, %v1277
    %v1341 = vadd.f32 %v1340, %v1278
    %v1342 = vadd.f32 %v1341, %v1279
    %v1343 = vadd.f32 %v1342, %v1280
    %v1344 = vadd.f32 %v1343, %v1281
    %v1345 = vadd.f32 %v1344, %v1282
    %v1346 = vadd.f32 %v1345, %v1283
    %v1347 = vadd.f32 %v1346, %v1284
    %v1348 = vadd.f32 %v1347, %v1285
    %v1349 = vadd.f32 %v1348, %v1286
    %v1350 = vadd.f32 %v1349, %v1287
    %v1351 = vadd.f32 %v1350, %v1288
    %v1352 = vadd.f32 %v1351, %v1289
    %v1353 = vadd.f32 %v1352, %v1290
    %v1354 = vadd.f32 %v1353, %v1291
    %v1355 = vadd.f32 %v1354, %v1292
    %v1356 = vadd.f32 %v1355, %v1293
    %v1357 = vadd.f32 %v1356, %v1294
    %v1358 = vadd.f32 %v1357, %v1295
    %v1359 = vadd.f32 %v1358, %v1296
    %v1360 = vadd.f32 %v1359, %v1297
    %v1361 = vadd.f32 %v1360, %v1298
    %v1362 = vadd.f32 %v1361, %v1299
    %v1363 = vadd.f32 %v1362, %v1300
    %v1364 = vadd.f32 %v1363, %v1301
    %v1365 = vadd.f32 %v1364, %v1302
    %v1366 = vadd.f32 %v1365, %v1303
    %v1367 = vadd.f32 %v1366, %v1304
    %v1368 = vadd.f32 %v1367, %v1305
    %v1369 = vadd.f32 %v1368, %v1306
    %v1370 = vadd.f32 %v1369, %v1307
    %v1371 = vadd.f32 %v1370, %v1308
    %v1372 = vadd.f32 %v1371, %v1309
    %v1373 = vadd.f32 %v1372, %v1310
    %v1374 = vadd.f32 %v1373, %v1311
    %v1375 = vadd.f32 %v1374, %v1312
    %v1376 = vadd.f32 %v1375, %v1313
    %v1377 = vadd.f32 %v1376, %v1314
    %v1378 = vadd.f32 %v1377, %v1315
    %v1379 = vadd.f32 %v1378, %v1316
    %v1380 = vadd.f32 %v1379, %v1317
    %v1381 = vadd.f32 %v1380, %v1318
    %v1382 = vadd.f32 %v1381, %v1319
    %v1383 = vrot.slane %v1382, 4
    %v1384 = vadd.f32 %v1382, %v1383
    %v1385 = vrot.slane %v1384, 2
    %v1386 = vadd.f32 %v1384, %v1385
    %v1387 = vrot.slane %v1386, 1
    %v1388 = vadd.f32 %v1386, %v1387
    %1389 = vst [vmem:[#allocation10 + $0x1] sm:$0x1] %v1388
    // Predicated region
    $region26: #{tpu_custom_call.1} parent=1 // pred_check
      _
    $region27: #{tpu_custom_call.1} parent=1 // pred_check_branch
      %1391 = sbr.rel (0) target = $region29
    $region28: #{tpu_custom_call.1} parent=1 // pred_region
      %s1393 = ssub.s32 4096, 4096
      %1394 = vsyncadd [#allocation4], %s1393
      %s1395 = sshll.u32 [#allocation7], 4
      %s1396 = int_to_ptr.vmem [resolvable:$true] %s1395
      %1401 = dma.vmem_to_hbm [thread:$0]  %s1396, 4096, %s4, [#allocation4], 64, 64, 4
    $region29: #{tpu_custom_call.1} parent=1 // pred_fallthru
      _
    // Predicated region
    $region30: #{tpu_custom_call.1} parent=1 // pred_check
      _
    $region31: #{tpu_custom_call.1} parent=1 // pred_check_branch
      %1403 = sbr.rel (0) target = $region33
    $region32: #{tpu_custom_call.1} parent=1 // pred_region
      %s1405 = ssub.s32 8192, 8192
      %1406 = vsyncadd [#allocation9], %s1405
      %s1407 = sshll.u32 [#allocation8], 4
      %s1408 = int_to_ptr.vmem [resolvable:$true] %s1407
      %1413 = dma.vmem_to_hbm [thread:$0]  %s1408, 8192, %s5, [#allocation9], 128, 128, 8
    $region33: #{tpu_custom_call.1} parent=1 // pred_fallthru
      _
    // Predicated region
    $region34: #{tpu_custom_call.1} parent=1 // pred_check
      _
    $region35: #{tpu_custom_call.1} parent=1 // pred_check_branch
      %1415 = sbr.rel (0) target = $region37
    $region36: #{tpu_custom_call.1} parent=1 // pred_region
      %s1417 = ssub.s32 32, 32
      %1418 = vsyncadd [#allocation9], %s1417
      %s1420 = sshll.u32 [#allocation10], 4
      %s1421 = int_to_ptr.vmem [resolvable:$true] %s1420
      %1423 = dma.vmem_to_hbm [thread:$0]  %s1421, 32, %s6, [#allocation9]
    $region37: #{tpu_custom_call.1} parent=1 // pred_fallthru
      _
    // Predicated region
    $region38: #{tpu_custom_call.1} parent=1 // pred_check
      _
    $region39: #{tpu_custom_call.1} parent=1 // pred_check_branch
      %1425 = sbr.rel (0) target = $region41
    $region40: #{tpu_custom_call.1} parent=1 // pred_region
      %1426 = dma.done [#allocation4], 4096
    $region41: #{tpu_custom_call.1} parent=1 // pred_fallthru
      _
    // Predicated region
    $region42: #{tpu_custom_call.1} parent=1 // pred_check
      _
    $region43: #{tpu_custom_call.1} parent=1 // pred_check_branch
      %1428 = sbr.rel (0) target = $region45
    $region44: #{tpu_custom_call.1} parent=1 // pred_region
      %1429 = dma.done [#allocation9], 8192
    $region45: #{tpu_custom_call.1} parent=1 // pred_fallthru
      _
    // Predicated region
    $region46: #{tpu_custom_call.1} parent=1 // pred_check
      _
    $region47: #{tpu_custom_call.1} parent=1 // pred_check_branch
      %1431 = sbr.rel (0) target = $region49
    $region48: #{tpu_custom_call.1} parent=1 // pred_region
      %1432 = dma.done [#allocation9], 32
    $region49: #{tpu_custom_call.1} parent=1 // pred_fallthru
      _
    %1433 = vsyncpa [#allocation3], 1
    %1434 = vsyncpa [#allocation6], 1
    %1435 = vsyncpa [#allocation4], 1
    %1436 = vsyncpa [#allocation9], 1

</llo_original>
